<compile_context>
chip_gen: v5e
topology: v5e:2x2
jax: 0.10.0
libtpu: 0.0.40
codegen_flags: <defaults>
</compile_context>

<pallas_src>
import functools

import jax
import jax.numpy as jnp
import numpy as np
from jax.experimental import pallas as pl
from jax.experimental.pallas import tpu as pltpu


# ----------------------------- fused model kernel -----------------------------
def _fused_lstm_mlp_kernel(*refs, num_layers, hidden_dim, seq, compute_dtype):
    """Fused multi-layer LSTM + Linear/PReLU/Linear/PReLU forward.

    refs layout (inputs ..., then output):
      x_ref                                (S, I)
      [w_ih_t, w_hh_t, b] * num_layers     (I_l, 4H), (H, 4H), (1, 4H)
      w1_t, b1                             (H, 1024), (1, 1024)
      w2_t, b2                             (1024, O_pad), (1, O_pad)
      alpha                                (1, 1)   SMEM scalar
      out_ref                              (S, O_pad)
    """
    H = hidden_dim
    x_ref = refs[0]
    idx = 1
    layers = []
    for _ in range(num_layers):
        layers.append((refs[idx], refs[idx + 1], refs[idx + 2]))
        idx += 3
    w1_t_ref, b1_ref, w2_t_ref, b2_ref, alpha_ref = refs[idx:idx + 5]
    out_ref = refs[idx + 5]

    alpha = alpha_ref[0, 0]

    # Lanes [2H, 3H) hold the cell ("g") gate -> tanh; all other lanes sigmoid.
    lane = jax.lax.broadcasted_iota(jnp.int32, (1, 4 * H), 1)
    g_mask = (lane >= 2 * H) & (lane < 3 * H)

    def mm(a, b_):
        return jnp.dot(a.astype(compute_dtype), b_,
                       preferred_element_type=jnp.float32)

    h_seq = x_ref[...]                                     # layer input (S, I_l)
    for (w_ih_t_ref, w_hh_t_ref, b_ref) in layers:
        w_hh_t = w_hh_t_ref[...]                           # (H, 4H)
        # Hoisted input projection: one (S,I)x(I,4H) matmul instead of S
        # M=1 matmuls sitting on the serial recurrence chain.
        ip = mm(h_seq, w_ih_t_ref[...]) + b_ref[...]       # (S, 4H)

        h = jnp.zeros((1, H), jnp.float32)
        c = jnp.zeros((1, H), jnp.float32)
        hs = []
        for t in range(seq):                               # fully unrolled
            gates = ip[t:t + 1, :] + mm(h, w_hh_t)         # (1, 4H)
            # Whole-vreg activation + per-lane select (EUP + VPU slots).
            act = jnp.where(g_mask, jnp.tanh(gates), jax.nn.sigmoid(gates))
            i_g = act[:, 0 * H:1 * H]
            f_g = act[:, 1 * H:2 * H]
            g_g = act[:, 2 * H:3 * H]
            o_g = act[:, 3 * H:4 * H]
            c = f_g * c + i_g * g_g
            h = o_g * jnp.tanh(c)
            hs.append(h)
        # Assemble the (S, H) layer output once (no per-step masked stores).
        h_seq = jnp.concatenate(hs, axis=0)

    # MLP head: Linear -> PReLU -> Linear -> PReLU (single shared alpha).
    # NOTE: at large S this should be tiled over the sequence with a grid
    # ("parallel" semantics) instead of whole-array VMEM residency.
    z1 = mm(h_seq, w1_t_ref[...]) + b1_ref[...]            # (S, 1024)
    z1 = jnp.where(z1 > 0, z1, alpha * z1)
    z2 = mm(z1, w2_t_ref[...]) + b2_ref[...]               # (S, O_pad)
    out_ref[...] = jnp.where(z2 > 0, z2, alpha * z2)       # single full store


# ---------------------------------- wrapper -----------------------------------
def lstm_model_forward(params, x, hidden_dim, compute_dtype=jnp.float32):
    """Forward pass of LSTM_Model on unbatched x:(seq, input_dim)."""
    seq = x.shape[0]
    num_layers = len(params["lstm"])
    output_dim = params["w2"].shape[0]
    o_pad = ((output_dim + 127) // 128) * 128              # lane-dense output

    def wt(w):
        return w.T.astype(compute_dtype)

    inputs = [x.astype(compute_dtype)]
    for lyr in params["lstm"]:
        inputs += [
            wt(lyr["w_ih"]), wt(lyr["w_hh"]),
            (lyr["b_ih"] + lyr["b_hh"]).reshape(1, -1).astype(jnp.float32),
        ]
    w2_t = jnp.zeros((params["w2"].shape[1], o_pad), compute_dtype)
    w2_t = w2_t.at[:, :output_dim].set(wt(params["w2"]))
    b2 = jnp.zeros((1, o_pad), jnp.float32).at[:, :output_dim].set(
        params["b2"].reshape(1, -1).astype(jnp.float32))
    inputs += [
        wt(params["w1"]),
        params["b1"].reshape(1, -1).astype(jnp.float32),
        w2_t, b2,
        jnp.asarray(params["prelu_alpha"], jnp.float32).reshape(1, 1),
    ]

    vmem = pl.BlockSpec(memory_space=pltpu.MemorySpace.VMEM)
    smem = pl.BlockSpec(memory_space=pltpu.MemorySpace.SMEM)   # scalar alpha

    kernel = functools.partial(
        _fused_lstm_mlp_kernel, num_layers=num_layers, hidden_dim=hidden_dim,
        seq=seq, compute_dtype=compute_dtype)

    out = pl.pallas_call(
        kernel,
        out_shape=jax.ShapeDtypeStruct((seq, o_pad), jnp.float32),
        in_specs=[vmem] * (len(inputs) - 1) + [smem],
        out_specs=vmem,
    )(*inputs)
    return jnp.squeeze(out[:, :output_dim])                # matches .squeeze()


# ------------------------------- params & reference ---------------------------
def init_params(key, input_dim, hidden_dim, layer_dim, output_dim):
    params = {"lstm": []}
    k = 1.0 / jnp.sqrt(hidden_dim)
    for layer in range(layer_dim):
        in_d = input_dim if layer == 0 else hidden_dim
        key, k1, k2, k3, k4 = jax.random.split(key, 5)
        params["lstm"].append(dict(
            w_ih=jax.random.uniform(k1, (4 * hidden_dim, in_d), jnp.float32, -k, k),
            w_hh=jax.random.uniform(k2, (4 * hidden_dim, hidden_dim), jnp.float32, -k, k),
            b_ih=jax.random.uniform(k3, (4 * hidden_dim,), jnp.float32, -k, k),
            b_hh=jax.random.uniform(k4, (4 * hidden_dim,), jnp.float32, -k, k),
        ))
    key, k1, k2, k3, k4 = jax.random.split(key, 5)
    s1 = 1.0 / jnp.sqrt(hidden_dim)
    s2 = 1.0 / jnp.sqrt(1024.0)
    params["w1"] = jax.random.uniform(k1, (1024, hidden_dim), jnp.float32, -s1, s1)
    params["b1"] = jax.random.uniform(k2, (1024,), jnp.float32, -s1, s1)
    params["w2"] = jax.random.uniform(k3, (output_dim, 1024), jnp.float32, -s2, s2)
    params["b2"] = jax.random.uniform(k4, (output_dim,), jnp.float32, -s2, s2)
    params["prelu_alpha"] = jnp.float32(0.25)              # nn.PReLU() default
    return params


def lstm_model_reference(params, x, hidden_dim):
    """Pure-JAX reference with PyTorch LSTM/PReLU semantics (for verification)."""
    H = hidden_dim
    hp = jax.lax.Precision.HIGHEST
    out = x
    for lyr in params["lstm"]:
        h = jnp.zeros((H,), jnp.float32)
        c = jnp.zeros((H,), jnp.float32)
        hs = []
        for t in range(out.shape[0]):
            gates = (jnp.dot(lyr["w_ih"], out[t], precision=hp) + lyr["b_ih"]
                     + jnp.dot(lyr["w_hh"], h, precision=hp) + lyr["b_hh"])
            i = jax.nn.sigmoid(gates[0 * H:1 * H])
            f = jax.nn.sigmoid(gates[1 * H:2 * H])
            g = jnp.tanh(gates[2 * H:3 * H])
            o = jax.nn.sigmoid(gates[3 * H:4 * H])
            c = f * c + i * g
            h = o * jnp.tanh(c)
            hs.append(h)
        out = jnp.stack(hs, axis=0)
    a = params["prelu_alpha"]
    z1 = jnp.dot(out, params["w1"].T, precision=hp) + params["b1"]
    z1 = jnp.where(z1 > 0, z1, a * z1)
    z2 = jnp.dot(z1, params["w2"].T, precision=hp) + params["b2"]
    z2 = jnp.where(z2 > 0, z2, a * z2)
    return jnp.squeeze(z2)


# ----------------------------------- main --------------------------------------
if __name__ == "__main__":
    input_dim, hidden_dim, layer_dim, seq_dim, output_dim = 16, 32, 2, 8, 4

    key = jax.random.PRNGKey(0)
    key, xk = jax.random.split(key)
    x = jax.random.normal(xk, (seq_dim, input_dim), jnp.float32)  # (seq, input_dim)

    params = init_params(key, input_dim, hidden_dim, layer_dim, output_dim)

    fwd = jax.jit(functools.partial(lstm_model_forward, hidden_dim=hidden_dim))
    out = jax.block_until_ready(fwd(params, x))
    assert out.shape == (seq_dim, output_dim), out.shape

    ref = jax.block_until_ready(lstm_model_reference(params, x, hidden_dim))
    np.testing.assert_allclose(np.asarray(out), np.asarray(ref),
                               rtol=1e-2, atol=1e-2)

    print("KERNEL_OK")
</pallas_src>

<mosaic_0001>
module attributes {stable_mosaic.version = 11 : i64} {
  func.func @_fused_lstm_mlp_kernel(%arg0: memref<8x16xf32, #tpu.memory_space<vmem>>, %arg1: memref<16x128xf32, #tpu.memory_space<vmem>>, %arg2: memref<32x128xf32, #tpu.memory_space<vmem>>, %arg3: memref<1x128xf32, #tpu.memory_space<vmem>>, %arg4: memref<32x128xf32, #tpu.memory_space<vmem>>, %arg5: memref<32x128xf32, #tpu.memory_space<vmem>>, %arg6: memref<1x128xf32, #tpu.memory_space<vmem>>, %arg7: memref<32x1024xf32, #tpu.memory_space<vmem>>, %arg8: memref<1x1024xf32, #tpu.memory_space<vmem>>, %arg9: memref<1024x128xf32, #tpu.memory_space<vmem>>, %arg10: memref<1x128xf32, #tpu.memory_space<vmem>>, %arg11: memref<1x1xf32, #tpu.memory_space<smem>>, %arg12: memref<8x128xf32, #tpu.memory_space<vmem>>) attributes {dimension_semantics = [], scalar_prefetch = 0 : i64, scratch_operands = 0 : i64, tpu.core_type = #tpu.core_type<tc>} {
    %c0 = arith.constant 0 : index
    %c0_0 = arith.constant 0 : index
    %0 = memref.load %arg11[%c0, %c0_0] : memref<1x1xf32, #tpu.memory_space<smem>>
    %1 = tpu.iota {dimensions = array<i32: 1>} : vector<1x128xi32>
    %c64_i32 = arith.constant 64 : i32
    %2 = vector.broadcast %c64_i32 : i32 to vector<1x128xi32>
    %3 = arith.cmpi sge, %1, %2 : vector<1x128xi32>
    %c96_i32 = arith.constant 96 : i32
    %4 = vector.broadcast %c96_i32 : i32 to vector<1x128xi32>
    %5 = arith.cmpi slt, %1, %4 : vector<1x128xi32>
    %6 = arith.andi %3, %5 : vector<1x128xi1>
    %c0_1 = arith.constant 0 : index
    %c0_2 = arith.constant 0 : index
    %7 = vector.load %arg0[%c0_1, %c0_2] : memref<8x16xf32, #tpu.memory_space<vmem>>, vector<8x16xf32>
    %c0_3 = arith.constant 0 : index
    %c0_4 = arith.constant 0 : index
    %8 = vector.load %arg2[%c0_3, %c0_4] : memref<32x128xf32, #tpu.memory_space<vmem>>, vector<32x128xf32>
    %c0_5 = arith.constant 0 : index
    %c0_6 = arith.constant 0 : index
    %9 = vector.load %arg1[%c0_5, %c0_6] : memref<16x128xf32, #tpu.memory_space<vmem>>, vector<16x128xf32>
    %cst = arith.constant dense<0.000000e+00> : vector<8x128xf32>
    %10 = tpu.matmul %7, %9, %cst {dimension_numbers = #tpu.dot_dimension_numbers<[1], [0], [0], [1], [0, 0, 1, 1], [], []>} : vector<8x16xf32>, vector<16x128xf32>, vector<8x128xf32> -> vector<8x128xf32>
    %c0_7 = arith.constant 0 : index
    %c0_8 = arith.constant 0 : index
    %11 = vector.load %arg3[%c0_7, %c0_8] : memref<1x128xf32, #tpu.memory_space<vmem>>, vector<1x128xf32>
    %12 = vector.broadcast %11 : vector<1x128xf32> to vector<8x128xf32>
    %13 = arith.addf %10, %12 : vector<8x128xf32>
    %cst_9 = arith.constant 0.000000e+00 : f32
    %14 = vector.broadcast %cst_9 : f32 to vector<1x32xf32>
    %cst_10 = arith.constant 0.000000e+00 : f32
    %15 = vector.broadcast %cst_10 : f32 to vector<1x32xf32>
    %16 = vector.extract_strided_slice %13 {offsets = [0, 0], sizes = [1, 128], strides = [1, 1]} : vector<8x128xf32> to vector<1x128xf32>
    %cst_11 = arith.constant dense<0.000000e+00> : vector<1x128xf32>
    %17 = tpu.matmul %14, %8, %cst_11 {dimension_numbers = #tpu.dot_dimension_numbers<[1], [0], [0], [1], [0, 0, 1, 1], [], []>} : vector<1x32xf32>, vector<32x128xf32>, vector<1x128xf32> -> vector<1x128xf32>
    %18 = arith.addf %16, %17 : vector<1x128xf32>
    %19 = math.tanh %18 : vector<1x128xf32>
    %20 = arith.negf %18 : vector<1x128xf32>
    %21 = math.exp %20 : vector<1x128xf32>
    %cst_12 = arith.constant 1.000000e+00 : f32
    %22 = vector.broadcast %cst_12 : f32 to vector<1x128xf32>
    %23 = arith.addf %22, %21 : vector<1x128xf32>
    %24 = arith.divf %22, %23 : vector<1x128xf32>
    %25 = arith.select %6, %19, %24 : vector<1x128xi1>, vector<1x128xf32>
    %26 = vector.extract_strided_slice %25 {offsets = [0, 0], sizes = [1, 32], strides = [1, 1]} : vector<1x128xf32> to vector<1x32xf32>
    %27 = vector.extract_strided_slice %25 {offsets = [0, 32], sizes = [1, 32], strides = [1, 1]} : vector<1x128xf32> to vector<1x32xf32>
    %28 = vector.extract_strided_slice %25 {offsets = [0, 64], sizes = [1, 32], strides = [1, 1]} : vector<1x128xf32> to vector<1x32xf32>
    %29 = vector.extract_strided_slice %25 {offsets = [0, 96], sizes = [1, 32], strides = [1, 1]} : vector<1x128xf32> to vector<1x32xf32>
    %30 = arith.mulf %27, %15 : vector<1x32xf32>
    %31 = arith.mulf %26, %28 : vector<1x32xf32>
    %32 = arith.addf %30, %31 : vector<1x32xf32>
    %33 = math.tanh %32 : vector<1x32xf32>
    %34 = arith.mulf %29, %33 : vector<1x32xf32>
    %35 = vector.extract_strided_slice %13 {offsets = [1, 0], sizes = [1, 128], strides = [1, 1]} : vector<8x128xf32> to vector<1x128xf32>
    %cst_13 = arith.constant dense<0.000000e+00> : vector<1x128xf32>
    %36 = tpu.matmul %34, %8, %cst_13 {dimension_numbers = #tpu.dot_dimension_numbers<[1], [0], [0], [1], [0, 0, 1, 1], [], []>} : vector<1x32xf32>, vector<32x128xf32>, vector<1x128xf32> -> vector<1x128xf32>
    %37 = arith.addf %35, %36 : vector<1x128xf32>
    %38 = math.tanh %37 : vector<1x128xf32>
    %39 = arith.negf %37 : vector<1x128xf32>
    %40 = math.exp %39 : vector<1x128xf32>
    %cst_14 = arith.constant 1.000000e+00 : f32
    %41 = vector.broadcast %cst_14 : f32 to vector<1x128xf32>
    %42 = arith.addf %41, %40 : vector<1x128xf32>
    %43 = arith.divf %41, %42 : vector<1x128xf32>
    %44 = arith.select %6, %38, %43 : vector<1x128xi1>, vector<1x128xf32>
    %45 = vector.extract_strided_slice %44 {offsets = [0, 0], sizes = [1, 32], strides = [1, 1]} : vector<1x128xf32> to vector<1x32xf32>
    %46 = vector.extract_strided_slice %44 {offsets = [0, 32], sizes = [1, 32], strides = [1, 1]} : vector<1x128xf32> to vector<1x32xf32>
    %47 = vector.extract_strided_slice %44 {offsets = [0, 64], sizes = [1, 32], strides = [1, 1]} : vector<1x128xf32> to vector<1x32xf32>
    %48 = vector.extract_strided_slice %44 {offsets = [0, 96], sizes = [1, 32], strides = [1, 1]} : vector<1x128xf32> to vector<1x32xf32>
    %49 = arith.mulf %46, %32 : vector<1x32xf32>
    %50 = arith.mulf %45, %47 : vector<1x32xf32>
    %51 = arith.addf %49, %50 : vector<1x32xf32>
    %52 = math.tanh %51 : vector<1x32xf32>
    %53 = arith.mulf %48, %52 : vector<1x32xf32>
    %54 = vector.extract_strided_slice %13 {offsets = [2, 0], sizes = [1, 128], strides = [1, 1]} : vector<8x128xf32> to vector<1x128xf32>
    %cst_15 = arith.constant dense<0.000000e+00> : vector<1x128xf32>
    %55 = tpu.matmul %53, %8, %cst_15 {dimension_numbers = #tpu.dot_dimension_numbers<[1], [0], [0], [1], [0, 0, 1, 1], [], []>} : vector<1x32xf32>, vector<32x128xf32>, vector<1x128xf32> -> vector<1x128xf32>
    %56 = arith.addf %54, %55 : vector<1x128xf32>
    %57 = math.tanh %56 : vector<1x128xf32>
    %58 = arith.negf %56 : vector<1x128xf32>
    %59 = math.exp %58 : vector<1x128xf32>
    %cst_16 = arith.constant 1.000000e+00 : f32
    %60 = vector.broadcast %cst_16 : f32 to vector<1x128xf32>
    %61 = arith.addf %60, %59 : vector<1x128xf32>
    %62 = arith.divf %60, %61 : vector<1x128xf32>
    %63 = arith.select %6, %57, %62 : vector<1x128xi1>, vector<1x128xf32>
    %64 = vector.extract_strided_slice %63 {offsets = [0, 0], sizes = [1, 32], strides = [1, 1]} : vector<1x128xf32> to vector<1x32xf32>
    %65 = vector.extract_strided_slice %63 {offsets = [0, 32], sizes = [1, 32], strides = [1, 1]} : vector<1x128xf32> to vector<1x32xf32>
    %66 = vector.extract_strided_slice %63 {offsets = [0, 64], sizes = [1, 32], strides = [1, 1]} : vector<1x128xf32> to vector<1x32xf32>
    %67 = vector.extract_strided_slice %63 {offsets = [0, 96], sizes = [1, 32], strides = [1, 1]} : vector<1x128xf32> to vector<1x32xf32>
    %68 = arith.mulf %65, %51 : vector<1x32xf32>
    %69 = arith.mulf %64, %66 : vector<1x32xf32>
    %70 = arith.addf %68, %69 : vector<1x32xf32>
    %71 = math.tanh %70 : vector<1x32xf32>
    %72 = arith.mulf %67, %71 : vector<1x32xf32>
    %73 = vector.extract_strided_slice %13 {offsets = [3, 0], sizes = [1, 128], strides = [1, 1]} : vector<8x128xf32> to vector<1x128xf32>
    %cst_17 = arith.constant dense<0.000000e+00> : vector<1x128xf32>
    %74 = tpu.matmul %72, %8, %cst_17 {dimension_numbers = #tpu.dot_dimension_numbers<[1], [0], [0], [1], [0, 0, 1, 1], [], []>} : vector<1x32xf32>, vector<32x128xf32>, vector<1x128xf32> -> vector<1x128xf32>
    %75 = arith.addf %73, %74 : vector<1x128xf32>
    %76 = math.tanh %75 : vector<1x128xf32>
    %77 = arith.negf %75 : vector<1x128xf32>
    %78 = math.exp %77 : vector<1x128xf32>
    %cst_18 = arith.constant 1.000000e+00 : f32
    %79 = vector.broadcast %cst_18 : f32 to vector<1x128xf32>
    %80 = arith.addf %79, %78 : vector<1x128xf32>
    %81 = arith.divf %79, %80 : vector<1x128xf32>
    %82 = arith.select %6, %76, %81 : vector<1x128xi1>, vector<1x128xf32>
    %83 = vector.extract_strided_slice %82 {offsets = [0, 0], sizes = [1, 32], strides = [1, 1]} : vector<1x128xf32> to vector<1x32xf32>
    %84 = vector.extract_strided_slice %82 {offsets = [0, 32], sizes = [1, 32], strides = [1, 1]} : vector<1x128xf32> to vector<1x32xf32>
    %85 = vector.extract_strided_slice %82 {offsets = [0, 64], sizes = [1, 32], strides = [1, 1]} : vector<1x128xf32> to vector<1x32xf32>
    %86 = vector.extract_strided_slice %82 {offsets = [0, 96], sizes = [1, 32], strides = [1, 1]} : vector<1x128xf32> to vector<1x32xf32>
    %87 = arith.mulf %84, %70 : vector<1x32xf32>
    %88 = arith.mulf %83, %85 : vector<1x32xf32>
    %89 = arith.addf %87, %88 : vector<1x32xf32>
    %90 = math.tanh %89 : vector<1x32xf32>
    %91 = arith.mulf %86, %90 : vector<1x32xf32>
    %92 = vector.extract_strided_slice %13 {offsets = [4, 0], sizes = [1, 128], strides = [1, 1]} : vector<8x128xf32> to vector<1x128xf32>
    %cst_19 = arith.constant dense<0.000000e+00> : vector<1x128xf32>
    %93 = tpu.matmul %91, %8, %cst_19 {dimension_numbers = #tpu.dot_dimension_numbers<[1], [0], [0], [1], [0, 0, 1, 1], [], []>} : vector<1x32xf32>, vector<32x128xf32>, vector<1x128xf32> -> vector<1x128xf32>
    %94 = arith.addf %92, %93 : vector<1x128xf32>
    %95 = math.tanh %94 : vector<1x128xf32>
    %96 = arith.negf %94 : vector<1x128xf32>
    %97 = math.exp %96 : vector<1x128xf32>
    %cst_20 = arith.constant 1.000000e+00 : f32
    %98 = vector.broadcast %cst_20 : f32 to vector<1x128xf32>
    %99 = arith.addf %98, %97 : vector<1x128xf32>
    %100 = arith.divf %98, %99 : vector<1x128xf32>
    %101 = arith.select %6, %95, %100 : vector<1x128xi1>, vector<1x128xf32>
    %102 = vector.extract_strided_slice %101 {offsets = [0, 0], sizes = [1, 32], strides = [1, 1]} : vector<1x128xf32> to vector<1x32xf32>
    %103 = vector.extract_strided_slice %101 {offsets = [0, 32], sizes = [1, 32], strides = [1, 1]} : vector<1x128xf32> to vector<1x32xf32>
    %104 = vector.extract_strided_slice %101 {offsets = [0, 64], sizes = [1, 32], strides = [1, 1]} : vector<1x128xf32> to vector<1x32xf32>
    %105 = vector.extract_strided_slice %101 {offsets = [0, 96], sizes = [1, 32], strides = [1, 1]} : vector<1x128xf32> to vector<1x32xf32>
    %106 = arith.mulf %103, %89 : vector<1x32xf32>
    %107 = arith.mulf %102, %104 : vector<1x32xf32>
    %108 = arith.addf %106, %107 : vector<1x32xf32>
    %109 = math.tanh %108 : vector<1x32xf32>
    %110 = arith.mulf %105, %109 : vector<1x32xf32>
    %111 = vector.extract_strided_slice %13 {offsets = [5, 0], sizes = [1, 128], strides = [1, 1]} : vector<8x128xf32> to vector<1x128xf32>
    %cst_21 = arith.constant dense<0.000000e+00> : vector<1x128xf32>
    %112 = tpu.matmul %110, %8, %cst_21 {dimension_numbers = #tpu.dot_dimension_numbers<[1], [0], [0], [1], [0, 0, 1, 1], [], []>} : vector<1x32xf32>, vector<32x128xf32>, vector<1x128xf32> -> vector<1x128xf32>
    %113 = arith.addf %111, %112 : vector<1x128xf32>
    %114 = math.tanh %113 : vector<1x128xf32>
    %115 = arith.negf %113 : vector<1x128xf32>
    %116 = math.exp %115 : vector<1x128xf32>
    %cst_22 = arith.constant 1.000000e+00 : f32
    %117 = vector.broadcast %cst_22 : f32 to vector<1x128xf32>
    %118 = arith.addf %117, %116 : vector<1x128xf32>
    %119 = arith.divf %117, %118 : vector<1x128xf32>
    %120 = arith.select %6, %114, %119 : vector<1x128xi1>, vector<1x128xf32>
    %121 = vector.extract_strided_slice %120 {offsets = [0, 0], sizes = [1, 32], strides = [1, 1]} : vector<1x128xf32> to vector<1x32xf32>
    %122 = vector.extract_strided_slice %120 {offsets = [0, 32], sizes = [1, 32], strides = [1, 1]} : vector<1x128xf32> to vector<1x32xf32>
    %123 = vector.extract_strided_slice %120 {offsets = [0, 64], sizes = [1, 32], strides = [1, 1]} : vector<1x128xf32> to vector<1x32xf32>
    %124 = vector.extract_strided_slice %120 {offsets = [0, 96], sizes = [1, 32], strides = [1, 1]} : vector<1x128xf32> to vector<1x32xf32>
    %125 = arith.mulf %122, %108 : vector<1x32xf32>
    %126 = arith.mulf %121, %123 : vector<1x32xf32>
    %127 = arith.addf %125, %126 : vector<1x32xf32>
    %128 = math.tanh %127 : vector<1x32xf32>
    %129 = arith.mulf %124, %128 : vector<1x32xf32>
    %130 = vector.extract_strided_slice %13 {offsets = [6, 0], sizes = [1, 128], strides = [1, 1]} : vector<8x128xf32> to vector<1x128xf32>
    %cst_23 = arith.constant dense<0.000000e+00> : vector<1x128xf32>
    %131 = tpu.matmul %129, %8, %cst_23 {dimension_numbers = #tpu.dot_dimension_numbers<[1], [0], [0], [1], [0, 0, 1, 1], [], []>} : vector<1x32xf32>, vector<32x128xf32>, vector<1x128xf32> -> vector<1x128xf32>
    %132 = arith.addf %130, %131 : vector<1x128xf32>
    %133 = math.tanh %132 : vector<1x128xf32>
    %134 = arith.negf %132 : vector<1x128xf32>
    %135 = math.exp %134 : vector<1x128xf32>
    %cst_24 = arith.constant 1.000000e+00 : f32
    %136 = vector.broadcast %cst_24 : f32 to vector<1x128xf32>
    %137 = arith.addf %136, %135 : vector<1x128xf32>
    %138 = arith.divf %136, %137 : vector<1x128xf32>
    %139 = arith.select %6, %133, %138 : vector<1x128xi1>, vector<1x128xf32>
    %140 = vector.extract_strided_slice %139 {offsets = [0, 0], sizes = [1, 32], strides = [1, 1]} : vector<1x128xf32> to vector<1x32xf32>
    %141 = vector.extract_strided_slice %139 {offsets = [0, 32], sizes = [1, 32], strides = [1, 1]} : vector<1x128xf32> to vector<1x32xf32>
    %142 = vector.extract_strided_slice %139 {offsets = [0, 64], sizes = [1, 32], strides = [1, 1]} : vector<1x128xf32> to vector<1x32xf32>
    %143 = vector.extract_strided_slice %139 {offsets = [0, 96], sizes = [1, 32], strides = [1, 1]} : vector<1x128xf32> to vector<1x32xf32>
    %144 = arith.mulf %141, %127 : vector<1x32xf32>
    %145 = arith.mulf %140, %142 : vector<1x32xf32>
    %146 = arith.addf %144, %145 : vector<1x32xf32>
    %147 = math.tanh %146 : vector<1x32xf32>
    %148 = arith.mulf %143, %147 : vector<1x32xf32>
    %149 = vector.extract_strided_slice %13 {offsets = [7, 0], sizes = [1, 128], strides = [1, 1]} : vector<8x128xf32> to vector<1x128xf32>
    %cst_25 = arith.constant dense<0.000000e+00> : vector<1x128xf32>
    %150 = tpu.matmul %148, %8, %cst_25 {dimension_numbers = #tpu.dot_dimension_numbers<[1], [0], [0], [1], [0, 0, 1, 1], [], []>} : vector<1x32xf32>, vector<32x128xf32>, vector<1x128xf32> -> vector<1x128xf32>
    %151 = arith.addf %149, %150 : vector<1x128xf32>
    %152 = math.tanh %151 : vector<1x128xf32>
    %153 = arith.negf %151 : vector<1x128xf32>
    %154 = math.exp %153 : vector<1x128xf32>
    %cst_26 = arith.constant 1.000000e+00 : f32
    %155 = vector.broadcast %cst_26 : f32 to vector<1x128xf32>
    %156 = arith.addf %155, %154 : vector<1x128xf32>
    %157 = arith.divf %155, %156 : vector<1x128xf32>
    %158 = arith.select %6, %152, %157 : vector<1x128xi1>, vector<1x128xf32>
    %159 = vector.extract_strided_slice %158 {offsets = [0, 0], sizes = [1, 32], strides = [1, 1]} : vector<1x128xf32> to vector<1x32xf32>
    %160 = vector.extract_strided_slice %158 {offsets = [0, 32], sizes = [1, 32], strides = [1, 1]} : vector<1x128xf32> to vector<1x32xf32>
    %161 = vector.extract_strided_slice %158 {offsets = [0, 64], sizes = [1, 32], strides = [1, 1]} : vector<1x128xf32> to vector<1x32xf32>
    %162 = vector.extract_strided_slice %158 {offsets = [0, 96], sizes = [1, 32], strides = [1, 1]} : vector<1x128xf32> to vector<1x32xf32>
    %163 = arith.mulf %160, %146 : vector<1x32xf32>
    %164 = arith.mulf %159, %161 : vector<1x32xf32>
    %165 = arith.addf %163, %164 : vector<1x32xf32>
    %166 = math.tanh %165 : vector<1x32xf32>
    %167 = arith.mulf %162, %166 : vector<1x32xf32>
    %168 = tpu.concatenate %34, %53, %72, %91, %110, %129, %148, %167 in 0 : vector<1x32xf32>, vector<1x32xf32>, vector<1x32xf32>, vector<1x32xf32>, vector<1x32xf32>, vector<1x32xf32>, vector<1x32xf32>, vector<1x32xf32> -> vector<8x32xf32>
    %c0_27 = arith.constant 0 : index
    %c0_28 = arith.constant 0 : index
    %169 = vector.load %arg5[%c0_27, %c0_28] : memref<32x128xf32, #tpu.memory_space<vmem>>, vector<32x128xf32>
    %c0_29 = arith.constant 0 : index
    %c0_30 = arith.constant 0 : index
    %170 = vector.load %arg4[%c0_29, %c0_30] : memref<32x128xf32, #tpu.memory_space<vmem>>, vector<32x128xf32>
    %cst_31 = arith.constant dense<0.000000e+00> : vector<8x128xf32>
    %171 = tpu.matmul %168, %170, %cst_31 {dimension_numbers = #tpu.dot_dimension_numbers<[1], [0], [0], [1], [0, 0, 1, 1], [], []>} : vector<8x32xf32>, vector<32x128xf32>, vector<8x128xf32> -> vector<8x128xf32>
    %c0_32 = arith.constant 0 : index
    %c0_33 = arith.constant 0 : index
    %172 = vector.load %arg6[%c0_32, %c0_33] : memref<1x128xf32, #tpu.memory_space<vmem>>, vector<1x128xf32>
    %173 = vector.broadcast %172 : vector<1x128xf32> to vector<8x128xf32>
    %174 = arith.addf %171, %173 : vector<8x128xf32>
    %cst_34 = arith.constant 0.000000e+00 : f32
    %175 = vector.broadcast %cst_34 : f32 to vector<1x32xf32>
    %cst_35 = arith.constant 0.000000e+00 : f32
    %176 = vector.broadcast %cst_35 : f32 to vector<1x32xf32>
    %177 = vector.extract_strided_slice %174 {offsets = [0, 0], sizes = [1, 128], strides = [1, 1]} : vector<8x128xf32> to vector<1x128xf32>
    %cst_36 = arith.constant dense<0.000000e+00> : vector<1x128xf32>
    %178 = tpu.matmul %175, %169, %cst_36 {dimension_numbers = #tpu.dot_dimension_numbers<[1], [0], [0], [1], [0, 0, 1, 1], [], []>} : vector<1x32xf32>, vector<32x128xf32>, vector<1x128xf32> -> vector<1x128xf32>
    %179 = arith.addf %177, %178 : vector<1x128xf32>
    %180 = math.tanh %179 : vector<1x128xf32>
    %181 = arith.negf %179 : vector<1x128xf32>
    %182 = math.exp %181 : vector<1x128xf32>
    %cst_37 = arith.constant 1.000000e+00 : f32
    %183 = vector.broadcast %cst_37 : f32 to vector<1x128xf32>
    %184 = arith.addf %183, %182 : vector<1x128xf32>
    %185 = arith.divf %183, %184 : vector<1x128xf32>
    %186 = arith.select %6, %180, %185 : vector<1x128xi1>, vector<1x128xf32>
    %187 = vector.extract_strided_slice %186 {offsets = [0, 0], sizes = [1, 32], strides = [1, 1]} : vector<1x128xf32> to vector<1x32xf32>
    %188 = vector.extract_strided_slice %186 {offsets = [0, 32], sizes = [1, 32], strides = [1, 1]} : vector<1x128xf32> to vector<1x32xf32>
    %189 = vector.extract_strided_slice %186 {offsets = [0, 64], sizes = [1, 32], strides = [1, 1]} : vector<1x128xf32> to vector<1x32xf32>
    %190 = vector.extract_strided_slice %186 {offsets = [0, 96], sizes = [1, 32], strides = [1, 1]} : vector<1x128xf32> to vector<1x32xf32>
    %191 = arith.mulf %188, %176 : vector<1x32xf32>
    %192 = arith.mulf %187, %189 : vector<1x32xf32>
    %193 = arith.addf %191, %192 : vector<1x32xf32>
    %194 = math.tanh %193 : vector<1x32xf32>
    %195 = arith.mulf %190, %194 : vector<1x32xf32>
    %196 = vector.extract_strided_slice %174 {offsets = [1, 0], sizes = [1, 128], strides = [1, 1]} : vector<8x128xf32> to vector<1x128xf32>
    %cst_38 = arith.constant dense<0.000000e+00> : vector<1x128xf32>
    %197 = tpu.matmul %195, %169, %cst_38 {dimension_numbers = #tpu.dot_dimension_numbers<[1], [0], [0], [1], [0, 0, 1, 1], [], []>} : vector<1x32xf32>, vector<32x128xf32>, vector<1x128xf32> -> vector<1x128xf32>
    %198 = arith.addf %196, %197 : vector<1x128xf32>
    %199 = math.tanh %198 : vector<1x128xf32>
    %200 = arith.negf %198 : vector<1x128xf32>
    %201 = math.exp %200 : vector<1x128xf32>
    %cst_39 = arith.constant 1.000000e+00 : f32
    %202 = vector.broadcast %cst_39 : f32 to vector<1x128xf32>
    %203 = arith.addf %202, %201 : vector<1x128xf32>
    %204 = arith.divf %202, %203 : vector<1x128xf32>
    %205 = arith.select %6, %199, %204 : vector<1x128xi1>, vector<1x128xf32>
    %206 = vector.extract_strided_slice %205 {offsets = [0, 0], sizes = [1, 32], strides = [1, 1]} : vector<1x128xf32> to vector<1x32xf32>
    %207 = vector.extract_strided_slice %205 {offsets = [0, 32], sizes = [1, 32], strides = [1, 1]} : vector<1x128xf32> to vector<1x32xf32>
    %208 = vector.extract_strided_slice %205 {offsets = [0, 64], sizes = [1, 32], strides = [1, 1]} : vector<1x128xf32> to vector<1x32xf32>
    %209 = vector.extract_strided_slice %205 {offsets = [0, 96], sizes = [1, 32], strides = [1, 1]} : vector<1x128xf32> to vector<1x32xf32>
    %210 = arith.mulf %207, %193 : vector<1x32xf32>
    %211 = arith.mulf %206, %208 : vector<1x32xf32>
    %212 = arith.addf %210, %211 : vector<1x32xf32>
    %213 = math.tanh %212 : vector<1x32xf32>
    %214 = arith.mulf %209, %213 : vector<1x32xf32>
    %215 = vector.extract_strided_slice %174 {offsets = [2, 0], sizes = [1, 128], strides = [1, 1]} : vector<8x128xf32> to vector<1x128xf32>
    %cst_40 = arith.constant dense<0.000000e+00> : vector<1x128xf32>
    %216 = tpu.matmul %214, %169, %cst_40 {dimension_numbers = #tpu.dot_dimension_numbers<[1], [0], [0], [1], [0, 0, 1, 1], [], []>} : vector<1x32xf32>, vector<32x128xf32>, vector<1x128xf32> -> vector<1x128xf32>
    %217 = arith.addf %215, %216 : vector<1x128xf32>
    %218 = math.tanh %217 : vector<1x128xf32>
    %219 = arith.negf %217 : vector<1x128xf32>
    %220 = math.exp %219 : vector<1x128xf32>
    %cst_41 = arith.constant 1.000000e+00 : f32
    %221 = vector.broadcast %cst_41 : f32 to vector<1x128xf32>
    %222 = arith.addf %221, %220 : vector<1x128xf32>
    %223 = arith.divf %221, %222 : vector<1x128xf32>
    %224 = arith.select %6, %218, %223 : vector<1x128xi1>, vector<1x128xf32>
    %225 = vector.extract_strided_slice %224 {offsets = [0, 0], sizes = [1, 32], strides = [1, 1]} : vector<1x128xf32> to vector<1x32xf32>
    %226 = vector.extract_strided_slice %224 {offsets = [0, 32], sizes = [1, 32], strides = [1, 1]} : vector<1x128xf32> to vector<1x32xf32>
    %227 = vector.extract_strided_slice %224 {offsets = [0, 64], sizes = [1, 32], strides = [1, 1]} : vector<1x128xf32> to vector<1x32xf32>
    %228 = vector.extract_strided_slice %224 {offsets = [0, 96], sizes = [1, 32], strides = [1, 1]} : vector<1x128xf32> to vector<1x32xf32>
    %229 = arith.mulf %226, %212 : vector<1x32xf32>
    %230 = arith.mulf %225, %227 : vector<1x32xf32>
    %231 = arith.addf %229, %230 : vector<1x32xf32>
    %232 = math.tanh %231 : vector<1x32xf32>
    %233 = arith.mulf %228, %232 : vector<1x32xf32>
    %234 = vector.extract_strided_slice %174 {offsets = [3, 0], sizes = [1, 128], strides = [1, 1]} : vector<8x128xf32> to vector<1x128xf32>
    %cst_42 = arith.constant dense<0.000000e+00> : vector<1x128xf32>
    %235 = tpu.matmul %233, %169, %cst_42 {dimension_numbers = #tpu.dot_dimension_numbers<[1], [0], [0], [1], [0, 0, 1, 1], [], []>} : vector<1x32xf32>, vector<32x128xf32>, vector<1x128xf32> -> vector<1x128xf32>
    %236 = arith.addf %234, %235 : vector<1x128xf32>
    %237 = math.tanh %236 : vector<1x128xf32>
    %238 = arith.negf %236 : vector<1x128xf32>
    %239 = math.exp %238 : vector<1x128xf32>
    %cst_43 = arith.constant 1.000000e+00 : f32
    %240 = vector.broadcast %cst_43 : f32 to vector<1x128xf32>
    %241 = arith.addf %240, %239 : vector<1x128xf32>
    %242 = arith.divf %240, %241 : vector<1x128xf32>
    %243 = arith.select %6, %237, %242 : vector<1x128xi1>, vector<1x128xf32>
    %244 = vector.extract_strided_slice %243 {offsets = [0, 0], sizes = [1, 32], strides = [1, 1]} : vector<1x128xf32> to vector<1x32xf32>
    %245 = vector.extract_strided_slice %243 {offsets = [0, 32], sizes = [1, 32], strides = [1, 1]} : vector<1x128xf32> to vector<1x32xf32>
    %246 = vector.extract_strided_slice %243 {offsets = [0, 64], sizes = [1, 32], strides = [1, 1]} : vector<1x128xf32> to vector<1x32xf32>
    %247 = vector.extract_strided_slice %243 {offsets = [0, 96], sizes = [1, 32], strides = [1, 1]} : vector<1x128xf32> to vector<1x32xf32>
    %248 = arith.mulf %245, %231 : vector<1x32xf32>
    %249 = arith.mulf %244, %246 : vector<1x32xf32>
    %250 = arith.addf %248, %249 : vector<1x32xf32>
    %251 = math.tanh %250 : vector<1x32xf32>
    %252 = arith.mulf %247, %251 : vector<1x32xf32>
    %253 = vector.extract_strided_slice %174 {offsets = [4, 0], sizes = [1, 128], strides = [1, 1]} : vector<8x128xf32> to vector<1x128xf32>
    %cst_44 = arith.constant dense<0.000000e+00> : vector<1x128xf32>
    %254 = tpu.matmul %252, %169, %cst_44 {dimension_numbers = #tpu.dot_dimension_numbers<[1], [0], [0], [1], [0, 0, 1, 1], [], []>} : vector<1x32xf32>, vector<32x128xf32>, vector<1x128xf32> -> vector<1x128xf32>
    %255 = arith.addf %253, %254 : vector<1x128xf32>
    %256 = math.tanh %255 : vector<1x128xf32>
    %257 = arith.negf %255 : vector<1x128xf32>
    %258 = math.exp %257 : vector<1x128xf32>
    %cst_45 = arith.constant 1.000000e+00 : f32
    %259 = vector.broadcast %cst_45 : f32 to vector<1x128xf32>
    %260 = arith.addf %259, %258 : vector<1x128xf32>
    %261 = arith.divf %259, %260 : vector<1x128xf32>
    %262 = arith.select %6, %256, %261 : vector<1x128xi1>, vector<1x128xf32>
    %263 = vector.extract_strided_slice %262 {offsets = [0, 0], sizes = [1, 32], strides = [1, 1]} : vector<1x128xf32> to vector<1x32xf32>
    %264 = vector.extract_strided_slice %262 {offsets = [0, 32], sizes = [1, 32], strides = [1, 1]} : vector<1x128xf32> to vector<1x32xf32>
    %265 = vector.extract_strided_slice %262 {offsets = [0, 64], sizes = [1, 32], strides = [1, 1]} : vector<1x128xf32> to vector<1x32xf32>
    %266 = vector.extract_strided_slice %262 {offsets = [0, 96], sizes = [1, 32], strides = [1, 1]} : vector<1x128xf32> to vector<1x32xf32>
    %267 = arith.mulf %264, %250 : vector<1x32xf32>
    %268 = arith.mulf %263, %265 : vector<1x32xf32>
    %269 = arith.addf %267, %268 : vector<1x32xf32>
    %270 = math.tanh %269 : vector<1x32xf32>
    %271 = arith.mulf %266, %270 : vector<1x32xf32>
    %272 = vector.extract_strided_slice %174 {offsets = [5, 0], sizes = [1, 128], strides = [1, 1]} : vector<8x128xf32> to vector<1x128xf32>
    %cst_46 = arith.constant dense<0.000000e+00> : vector<1x128xf32>
    %273 = tpu.matmul %271, %169, %cst_46 {dimension_numbers = #tpu.dot_dimension_numbers<[1], [0], [0], [1], [0, 0, 1, 1], [], []>} : vector<1x32xf32>, vector<32x128xf32>, vector<1x128xf32> -> vector<1x128xf32>
    %274 = arith.addf %272, %273 : vector<1x128xf32>
    %275 = math.tanh %274 : vector<1x128xf32>
    %276 = arith.negf %274 : vector<1x128xf32>
    %277 = math.exp %276 : vector<1x128xf32>
    %cst_47 = arith.constant 1.000000e+00 : f32
    %278 = vector.broadcast %cst_47 : f32 to vector<1x128xf32>
    %279 = arith.addf %278, %277 : vector<1x128xf32>
    %280 = arith.divf %278, %279 : vector<1x128xf32>
    %281 = arith.select %6, %275, %280 : vector<1x128xi1>, vector<1x128xf32>
    %282 = vector.extract_strided_slice %281 {offsets = [0, 0], sizes = [1, 32], strides = [1, 1]} : vector<1x128xf32> to vector<1x32xf32>
    %283 = vector.extract_strided_slice %281 {offsets = [0, 32], sizes = [1, 32], strides = [1, 1]} : vector<1x128xf32> to vector<1x32xf32>
    %284 = vector.extract_strided_slice %281 {offsets = [0, 64], sizes = [1, 32], strides = [1, 1]} : vector<1x128xf32> to vector<1x32xf32>
    %285 = vector.extract_strided_slice %281 {offsets = [0, 96], sizes = [1, 32], strides = [1, 1]} : vector<1x128xf32> to vector<1x32xf32>
    %286 = arith.mulf %283, %269 : vector<1x32xf32>
    %287 = arith.mulf %282, %284 : vector<1x32xf32>
    %288 = arith.addf %286, %287 : vector<1x32xf32>
    %289 = math.tanh %288 : vector<1x32xf32>
    %290 = arith.mulf %285, %289 : vector<1x32xf32>
    %291 = vector.extract_strided_slice %174 {offsets = [6, 0], sizes = [1, 128], strides = [1, 1]} : vector<8x128xf32> to vector<1x128xf32>
    %cst_48 = arith.constant dense<0.000000e+00> : vector<1x128xf32>
    %292 = tpu.matmul %290, %169, %cst_48 {dimension_numbers = #tpu.dot_dimension_numbers<[1], [0], [0], [1], [0, 0, 1, 1], [], []>} : vector<1x32xf32>, vector<32x128xf32>, vector<1x128xf32> -> vector<1x128xf32>
    %293 = arith.addf %291, %292 : vector<1x128xf32>
    %294 = math.tanh %293 : vector<1x128xf32>
    %295 = arith.negf %293 : vector<1x128xf32>
    %296 = math.exp %295 : vector<1x128xf32>
    %cst_49 = arith.constant 1.000000e+00 : f32
    %297 = vector.broadcast %cst_49 : f32 to vector<1x128xf32>
    %298 = arith.addf %297, %296 : vector<1x128xf32>
    %299 = arith.divf %297, %298 : vector<1x128xf32>
    %300 = arith.select %6, %294, %299 : vector<1x128xi1>, vector<1x128xf32>
    %301 = vector.extract_strided_slice %300 {offsets = [0, 0], sizes = [1, 32], strides = [1, 1]} : vector<1x128xf32> to vector<1x32xf32>
    %302 = vector.extract_strided_slice %300 {offsets = [0, 32], sizes = [1, 32], strides = [1, 1]} : vector<1x128xf32> to vector<1x32xf32>
    %303 = vector.extract_strided_slice %300 {offsets = [0, 64], sizes = [1, 32], strides = [1, 1]} : vector<1x128xf32> to vector<1x32xf32>
    %304 = vector.extract_strided_slice %300 {offsets = [0, 96], sizes = [1, 32], strides = [1, 1]} : vector<1x128xf32> to vector<1x32xf32>
    %305 = arith.mulf %302, %288 : vector<1x32xf32>
    %306 = arith.mulf %301, %303 : vector<1x32xf32>
    %307 = arith.addf %305, %306 : vector<1x32xf32>
    %308 = math.tanh %307 : vector<1x32xf32>
    %309 = arith.mulf %304, %308 : vector<1x32xf32>
    %310 = vector.extract_strided_slice %174 {offsets = [7, 0], sizes = [1, 128], strides = [1, 1]} : vector<8x128xf32> to vector<1x128xf32>
    %cst_50 = arith.constant dense<0.000000e+00> : vector<1x128xf32>
    %311 = tpu.matmul %309, %169, %cst_50 {dimension_numbers = #tpu.dot_dimension_numbers<[1], [0], [0], [1], [0, 0, 1, 1], [], []>} : vector<1x32xf32>, vector<32x128xf32>, vector<1x128xf32> -> vector<1x128xf32>
    %312 = arith.addf %310, %311 : vector<1x128xf32>
    %313 = math.tanh %312 : vector<1x128xf32>
    %314 = arith.negf %312 : vector<1x128xf32>
    %315 = math.exp %314 : vector<1x128xf32>
    %cst_51 = arith.constant 1.000000e+00 : f32
    %316 = vector.broadcast %cst_51 : f32 to vector<1x128xf32>
    %317 = arith.addf %316, %315 : vector<1x128xf32>
    %318 = arith.divf %316, %317 : vector<1x128xf32>
    %319 = arith.select %6, %313, %318 : vector<1x128xi1>, vector<1x128xf32>
    %320 = vector.extract_strided_slice %319 {offsets = [0, 0], sizes = [1, 32], strides = [1, 1]} : vector<1x128xf32> to vector<1x32xf32>
    %321 = vector.extract_strided_slice %319 {offsets = [0, 32], sizes = [1, 32], strides = [1, 1]} : vector<1x128xf32> to vector<1x32xf32>
    %322 = vector.extract_strided_slice %319 {offsets = [0, 64], sizes = [1, 32], strides = [1, 1]} : vector<1x128xf32> to vector<1x32xf32>
    %323 = vector.extract_strided_slice %319 {offsets = [0, 96], sizes = [1, 32], strides = [1, 1]} : vector<1x128xf32> to vector<1x32xf32>
    %324 = arith.mulf %321, %307 : vector<1x32xf32>
    %325 = arith.mulf %320, %322 : vector<1x32xf32>
    %326 = arith.addf %324, %325 : vector<1x32xf32>
    %327 = math.tanh %326 : vector<1x32xf32>
    %328 = arith.mulf %323, %327 : vector<1x32xf32>
    %329 = tpu.concatenate %195, %214, %233, %252, %271, %290, %309, %328 in 0 : vector<1x32xf32>, vector<1x32xf32>, vector<1x32xf32>, vector<1x32xf32>, vector<1x32xf32>, vector<1x32xf32>, vector<1x32xf32>, vector<1x32xf32> -> vector<8x32xf32>
    %c0_52 = arith.constant 0 : index
    %c0_53 = arith.constant 0 : index
    %330 = vector.load %arg7[%c0_52, %c0_53] : memref<32x1024xf32, #tpu.memory_space<vmem>>, vector<32x1024xf32>
    %cst_54 = arith.constant dense<0.000000e+00> : vector<8x1024xf32>
    %331 = tpu.matmul %329, %330, %cst_54 {dimension_numbers = #tpu.dot_dimension_numbers<[1], [0], [0], [1], [0, 0, 1, 1], [], []>} : vector<8x32xf32>, vector<32x1024xf32>, vector<8x1024xf32> -> vector<8x1024xf32>
    %c0_55 = arith.constant 0 : index
    %c0_56 = arith.constant 0 : index
    %332 = vector.load %arg8[%c0_55, %c0_56] : memref<1x1024xf32, #tpu.memory_space<vmem>>, vector<1x1024xf32>
    %333 = vector.broadcast %332 : vector<1x1024xf32> to vector<8x1024xf32>
    %334 = arith.addf %331, %333 : vector<8x1024xf32>
    %cst_57 = arith.constant 0.000000e+00 : f32
    %335 = vector.broadcast %cst_57 : f32 to vector<8x1024xf32>
    %336 = arith.cmpf ogt, %334, %335 : vector<8x1024xf32>
    %337 = vector.broadcast %0 : f32 to vector<8x1024xf32>
    %338 = arith.mulf %337, %334 : vector<8x1024xf32>
    %339 = arith.select %336, %334, %338 : vector<8x1024xi1>, vector<8x1024xf32>
    %c0_58 = arith.constant 0 : index
    %c0_59 = arith.constant 0 : index
    %340 = vector.load %arg9[%c0_58, %c0_59] : memref<1024x128xf32, #tpu.memory_space<vmem>>, vector<1024x128xf32>
    %cst_60 = arith.constant dense<0.000000e+00> : vector<8x128xf32>
    %341 = tpu.matmul %339, %340, %cst_60 {dimension_numbers = #tpu.dot_dimension_numbers<[1], [0], [0], [1], [0, 0, 1, 1], [], []>} : vector<8x1024xf32>, vector<1024x128xf32>, vector<8x128xf32> -> vector<8x128xf32>
    %c0_61 = arith.constant 0 : index
    %c0_62 = arith.constant 0 : index
    %342 = vector.load %arg10[%c0_61, %c0_62] : memref<1x128xf32, #tpu.memory_space<vmem>>, vector<1x128xf32>
    %343 = vector.broadcast %342 : vector<1x128xf32> to vector<8x128xf32>
    %344 = arith.addf %341, %343 : vector<8x128xf32>
    %cst_63 = arith.constant 0.000000e+00 : f32
    %345 = vector.broadcast %cst_63 : f32 to vector<8x128xf32>
    %346 = arith.cmpf ogt, %344, %345 : vector<8x128xf32>
    %347 = vector.broadcast %0 : f32 to vector<8x128xf32>
    %348 = arith.mulf %347, %344 : vector<8x128xf32>
    %349 = arith.select %346, %344, %348 : vector<8x128xi1>, vector<8x128xf32>
    %c0_64 = arith.constant 0 : index
    %c0_65 = arith.constant 0 : index
    %350 = vector.load %arg12[%c0_64, %c0_65] : memref<8x128xf32, #tpu.memory_space<vmem>>, vector<8x128xf32>
    tpu.vector_store %arg12[%c0_64, %c0_65], %349 {strides = array<i32>} : memref<8x128xf32, #tpu.memory_space<vmem>>, vector<8x128xf32>,
    return
  }
}

</mosaic_0001>

<llo_original>
// kernel: lstm_model_forward.1
$region0: #{lstm_model_forward.1}
  #allocation0 [shape = 'u32[]', space=smem, size = 0x4, offset = 0x4, fixed_abs, tag = 'smem constant byte address 0x4 - core index']
  #allocation1 [shape = 'u32[72,128]{1,0:T(1,128)}', space=vmem, size = 0x9000, scoped, tag = 'internal scratch']
  #allocation2 [shape = 'f32[1,1]{1,0:T(1,128)S(6)}', space=smem, size = 0x200, scoped, tag = 'scoped memory for lstm_model_forward.1']
  %s0 = inlined_call_operand.vmem [shape: f32[8,16], index: 0, kind: input, shape index: {}]
  %s1 = inlined_call_operand.vmem [shape: f32[16,128], index: 1, kind: input, shape index: {}]
  %s2 = inlined_call_operand.vmem [shape: f32[32,128], index: 2, kind: input, shape index: {}]
  %s3 = inlined_call_operand.vmem [shape: f32[1,128], index: 3, kind: input, shape index: {}]
  %s4 = inlined_call_operand.vmem [shape: f32[32,128], index: 4, kind: input, shape index: {}]
  %s5 = inlined_call_operand.vmem [shape: f32[32,128], index: 5, kind: input, shape index: {}]
  %s6 = inlined_call_operand.vmem [shape: f32[1,128], index: 6, kind: input, shape index: {}]
  %s7 = inlined_call_operand.vmem [shape: f32[32,1024], index: 7, kind: input, shape index: {}]
  %s8 = inlined_call_operand.vmem [shape: f32[1,1024], index: 8, kind: input, shape index: {}]
  %s9 = inlined_call_operand.vmem [shape: f32[1024,128], index: 9, kind: input, shape index: {}]
  %s10 = inlined_call_operand.vmem [shape: f32[1,128], index: 10, kind: input, shape index: {}]
  %s11 = inlined_call_operand.<no memory space> [shape: f32[1,1], index: 11, kind: input, shape index: {}]
  %s12 = inlined_call_operand.vmem [shape: f32[8,128], index: 12, kind: output, shape index: {}]
  %s13 = sld [smem:[#allocation0]]
  $region58: #{lstm_model_forward.1} parent=0
    _
  %s15 = ssub.s32 1, %s13
  %s16 = scalar_select 0, %s15, %s13
  %17 = sst [smem:[#allocation2]] %s11
  // Predicated region
  $region2: #{lstm_model_forward.1} parent=0 // pred_check
    _
  $region3: #{lstm_model_forward.1} parent=0 // pred_check_branch
    %19 = sbr.rel (0) target = $region5
  $region4: #{lstm_model_forward.1} parent=0 // pred_region
    _
  $region5: #{lstm_model_forward.1} parent=0 // pred_fallthru
    _
  // Predicated region
  $region6: #{lstm_model_forward.1} parent=0 // pred_check
    _
  $region7: #{lstm_model_forward.1} parent=0 // pred_check_branch
    %21 = sbr.rel (0) target = $region9
  $region8: #{lstm_model_forward.1} parent=0 // pred_region
    _
  $region9: #{lstm_model_forward.1} parent=0 // pred_fallthru
    _
  // Predicated region
  $region10: #{lstm_model_forward.1} parent=0 // pred_check
    _
  $region11: #{lstm_model_forward.1} parent=0 // pred_check_branch
    %23 = sbr.rel (0) target = $region13
  $region12: #{lstm_model_forward.1} parent=0 // pred_region
    _
  $region13: #{lstm_model_forward.1} parent=0 // pred_fallthru
    _
  // Predicated region
  $region14: #{lstm_model_forward.1} parent=0 // pred_check
    _
  $region15: #{lstm_model_forward.1} parent=0 // pred_check_branch
    %25 = sbr.rel (0) target = $region17
  $region16: #{lstm_model_forward.1} parent=0 // pred_region
    _
  $region17: #{lstm_model_forward.1} parent=0 // pred_fallthru
    _
  // Predicated region
  $region18: #{lstm_model_forward.1} parent=0 // pred_check
    _
  $region19: #{lstm_model_forward.1} parent=0 // pred_check_branch
    %27 = sbr.rel (0) target = $region21
  $region20: #{lstm_model_forward.1} parent=0 // pred_region
    _
  $region21: #{lstm_model_forward.1} parent=0 // pred_fallthru
    _
  // Predicated region
  $region22: #{lstm_model_forward.1} parent=0 // pred_check
    _
  $region23: #{lstm_model_forward.1} parent=0 // pred_check_branch
    %29 = sbr.rel (0) target = $region25
  $region24: #{lstm_model_forward.1} parent=0 // pred_region
    _
  $region25: #{lstm_model_forward.1} parent=0 // pred_fallthru
    _
  // Predicated region
  $region26: #{lstm_model_forward.1} parent=0 // pred_check
    _
  $region27: #{lstm_model_forward.1} parent=0 // pred_check_branch
    %31 = sbr.rel (0) target = $region29
  $region28: #{lstm_model_forward.1} parent=0 // pred_region
    _
  $region29: #{lstm_model_forward.1} parent=0 // pred_fallthru
    _
  // Predicated region
  $region30: #{lstm_model_forward.1} parent=0 // pred_check
    _
  $region31: #{lstm_model_forward.1} parent=0 // pred_check_branch
    %33 = sbr.rel (0) target = $region33
  $region32: #{lstm_model_forward.1} parent=0 // pred_region
    _
  $region33: #{lstm_model_forward.1} parent=0 // pred_fallthru
    _
  // Predicated region
  $region34: #{lstm_model_forward.1} parent=0 // pred_check
    _
  $region35: #{lstm_model_forward.1} parent=0 // pred_check_branch
    %35 = sbr.rel (0) target = $region37
  $region36: #{lstm_model_forward.1} parent=0 // pred_region
    _
  $region37: #{lstm_model_forward.1} parent=0 // pred_fallthru
    _
  // Predicated region
  $region38: #{lstm_model_forward.1} parent=0 // pred_check
    _
  $region39: #{lstm_model_forward.1} parent=0 // pred_check_branch
    %37 = sbr.rel (0) target = $region41
  $region40: #{lstm_model_forward.1} parent=0 // pred_region
    _
  $region41: #{lstm_model_forward.1} parent=0 // pred_fallthru
    _
  // Predicated region
  $region42: #{lstm_model_forward.1} parent=0 // pred_check
    _
  $region43: #{lstm_model_forward.1} parent=0 // pred_check_branch
    %39 = sbr.rel (0) target = $region45
  $region44: #{lstm_model_forward.1} parent=0 // pred_region
    _
  $region45: #{lstm_model_forward.1} parent=0 // pred_fallthru
    _
  // Predicated region
  $region46: #{lstm_model_forward.1} parent=0 // pred_check
    _
  $region47: #{lstm_model_forward.1} parent=0 // pred_check_branch
    %41 = sbr.rel (0) target = $region49
  $region48: #{lstm_model_forward.1} parent=0 // pred_region
    _
  $region49: #{lstm_model_forward.1} parent=0 // pred_fallthru
    _
  %s42 = sld [smem:[#allocation2]]
  %v43 = vlaneseq
  %v44 = vand.u32 %v43, 127
  %vm45 = vcmp.ge.s32.totalorder %v44, 64
  %vm46 = vcmp.lt.s32.totalorder %v44, 96
  %vm47 = vmand %vm45, %vm46
  %v48 = vld [vmem:[%s0] sm:$0xff]
  %v49 = vld [vmem:[%s2] sm:$0xff]
  %v50 = vld [vmem:[%s2 + $0x8] sm:$0xff]
  %v51 = vld [vmem:[%s2 + $0x10] sm:$0xff]
  %v52 = vld [vmem:[%s2 + $0x18] sm:$0xff]
  %v53 = vld [vmem:[%s1] sm:$0xff]
  %v54 = vld [vmem:[%s1 + $0x8] sm:$0xff]
  %v55 = vld [vmem:[%s3] sm:$0x1]
  %v57 = vperm.slane %v55, 0
  %vm59 = vcmask 130048
  %v61 = vsel %vm59, %v48, 0
  %63 = vmatpush.msra.mxu0 0.0
  %64 = vmatpush.msra.mxu0 0.0
  %65 = vmatpush.msra.mxu0 0.0
  %66 = vmatpush.msra.mxu0 0.0
  %67 = vmatpush.msra.mxu0 0.0
  %68 = vmatpush.msra.mxu0 0.0
  %69 = vmatpush.msra.mxu0 0.0
  %70 = vmatpush.msra.mxu0 0.0
  %71 = vmatpush.msra.mxu0 0.0
  %72 = vmatpush.msra.mxu0 0.0
  %73 = vmatpush.msra.mxu0 0.0
  %74 = vmatpush.msra.mxu0 0.0
  %75 = vmatpush.msra.mxu0 0.0
  %76 = vmatpush.msra.mxu0 0.0
  %77 = vmatpush.msra.mxu0 %v54
  %78 = vmatpush.msra.mxu0 %v53
  %79 = vmatmul.f32.gmra.mxu0 %v61
  %v80 = vpop.f32.mrf.mxu0
  %v81 = vadd.f32 %v57, %v80
  %82 = vdwg.mxu0
  %vm83 = vcmask 261120
  %v85 = vsel %vm83, 0.0, 0
  %87 = vmatpush.msra.mxu0 0.0
  %88 = vmatpush.msra.mxu0 0.0
  %89 = vmatpush.msra.mxu0 0.0
  %90 = vmatpush.msra.mxu0 0.0
  %91 = vmatpush.msra.mxu0 0.0
  %92 = vmatpush.msra.mxu0 0.0
  %93 = vmatpush.msra.mxu0 0.0
  %94 = vmatpush.msra.mxu0 0.0
  %95 = vmatpush.msra.mxu0 0.0
  %96 = vmatpush.msra.mxu0 0.0
  %97 = vmatpush.msra.mxu0 0.0
  %98 = vmatpush.msra.mxu0 0.0
  %99 = vmatpush.msra.mxu0 %v52
  %100 = vmatpush.msra.mxu0 %v51
  %101 = vmatpush.msra.mxu0 %v50
  %102 = vmatpush.msra.mxu0 %v49
  %103 = vmatmul.f32.gmra.mxu0 %v85
  %v104 = vpop.f32.mrf.mxu0
  %v105 = vadd.f32 0.0, %v104
  %106 = vdwg.mxu0
  %v107 = vadd.f32 %v81, %v105
  %v108 = vtanh.pop %v107
  %v109 = vxor.u32 %v107, 2147483648
  %v110 = vmul.f32 %v109, 1.442695
  %v111 = vpow.pop %v110
  %v112 = vadd.f32 %v111, 1.0
  %v113 = vrcp.pop %v112
  %v114 = vmul.f32 %v112, %v113
  %v115 = vsub.f32 1.0, %v114
  %v116 = vmul.f32 %v113, %v115
  %v117 = vadd.f32 %v113, %v116
  %vm118 = vweird.f32 %v112
  %vm119 = vweird.f32 %v113
  %vm120 = vmor %vm118, %vm119
  %v121 = vsel %vm120, %v113, %v117
  %v122 = vand.u32 2147483647, %v112
  %vm123 = vcmp.eq.f32.partialorder %v122, 8.507059e+37
  %v124 = vand.u32 %v112, 2147483648
  %v125 = vor.u32 1.1754944e-38, %v124
  %v126 = vsel %vm123, %v125, %v121
  %v127 = vmul.f32 1.0, %v126
  %v128 = vsel %vm47, %v108, %v127
  %v129 = vmul.f32 %v128, 0.0
  %131 = vrot.lane.b32.xlu0 %v128, 64
  %v132 = vpop.permute.xlu0 %131
  %v134 = vmul.f32 %v128, %v132
  %136 = vrot.lane.b32.xlu0 %v134, 32
  %v137 = vpop.permute.xlu0 %136
  %v139 = vadd.f32 %v129, %v137
  %v140 = vtanh.pop %v139
  %142 = vrot.lane.b32.xlu0 %v140, 64
  %v143 = vpop.permute.xlu0 %142
  %v145 = vmul.f32 %v128, %v143
  %147 = vrot.lane.b32.xlu0 %v145, 32
  %v148 = vpop.permute.xlu0 %147
  %v149 = vsel %vm83, %v148, 0
  %151 = vmatpush.msra.mxu0 0.0
  %152 = vmatpush.msra.mxu0 0.0
  %153 = vmatpush.msra.mxu0 0.0
  %154 = vmatpush.msra.mxu0 0.0
  %155 = vmatpush.msra.mxu0 0.0
  %156 = vmatpush.msra.mxu0 0.0
  %157 = vmatpush.msra.mxu0 0.0
  %158 = vmatpush.msra.mxu0 0.0
  %159 = vmatpush.msra.mxu0 0.0
  %160 = vmatpush.msra.mxu0 0.0
  %161 = vmatpush.msra.mxu0 0.0
  %162 = vmatpush.msra.mxu0 0.0
  %163 = vmatpush.msra.mxu0 %v52
  %164 = vmatpush.msra.mxu0 %v51
  %165 = vmatpush.msra.mxu0 %v50
  %166 = vmatpush.msra.mxu0 %v49
  %167 = vmatmul.f32.gmra.mxu0 %v149
  %v168 = vpop.f32.mrf.mxu0
  %v169 = vadd.f32 0.0, %v168
  %170 = vdwg.mxu0
  %v172 = vrot.slane %v169, 7
  %v174 = vadd.f32 %v81, %v172
  %v175 = vtanh.pop %v174
  %v176 = vxor.u32 %v174, 2147483648
  %v177 = vmul.f32 %v176, 1.442695
  %v178 = vpow.pop %v177
  %v179 = vadd.f32 %v178, 1.0
  %v180 = vrcp.pop %v179
  %v181 = vmul.f32 %v179, %v180
  %v182 = vsub.f32 1.0, %v181
  %v183 = vmul.f32 %v180, %v182
  %v184 = vadd.f32 %v180, %v183
  %vm185 = vweird.f32 %v179
  %vm186 = vweird.f32 %v180
  %vm187 = vmor %vm185, %vm186
  %v188 = vsel %vm187, %v180, %v184
  %v189 = vand.u32 2147483647, %v179
  %vm190 = vcmp.eq.f32.partialorder %v189, 8.507059e+37
  %v191 = vand.u32 %v179, 2147483648
  %v192 = vor.u32 1.1754944e-38, %v191
  %v193 = vsel %vm190, %v192, %v188
  %v194 = vmul.f32 1.0, %v193
  %v195 = vsel %vm47, %v175, %v194
  %v197 = vrot.slane %v139, 7
  %v199 = vmul.f32 %v195, %v197
  %201 = vrot.lane.b32.xlu0 %v195, 64
  %v202 = vpop.permute.xlu0 %201
  %v204 = vmul.f32 %v195, %v202
  %206 = vrot.lane.b32.xlu0 %v204, 32
  %v207 = vpop.permute.xlu0 %206
  %v209 = vadd.f32 %v199, %v207
  %v210 = vtanh.pop %v209
  %212 = vrot.lane.b32.xlu0 %v210, 64
  %v213 = vpop.permute.xlu0 %212
  %v215 = vmul.f32 %v195, %v213
  %v217 = vrot.slane %v215, 1
  %218 = vrot.lane.b32.xlu0 %v217, 32
  %v219 = vpop.permute.xlu0 %218
  %v220 = vsel %vm83, %v219, 0
  %222 = vmatpush.msra.mxu0 0.0
  %223 = vmatpush.msra.mxu0 0.0
  %224 = vmatpush.msra.mxu0 0.0
  %225 = vmatpush.msra.mxu0 0.0
  %226 = vmatpush.msra.mxu0 0.0
  %227 = vmatpush.msra.mxu0 0.0
  %228 = vmatpush.msra.mxu0 0.0
  %229 = vmatpush.msra.mxu0 0.0
  %230 = vmatpush.msra.mxu0 0.0
  %231 = vmatpush.msra.mxu0 0.0
  %232 = vmatpush.msra.mxu0 0.0
  %233 = vmatpush.msra.mxu0 0.0
  %234 = vmatpush.msra.mxu0 %v52
  %235 = vmatpush.msra.mxu0 %v51
  %236 = vmatpush.msra.mxu0 %v50
  %237 = vmatpush.msra.mxu0 %v49
  %238 = vmatmul.f32.gmra.mxu0 %v220
  %v239 = vpop.f32.mrf.mxu0
  %v240 = vadd.f32 0.0, %v239
  %241 = vdwg.mxu0
  %v243 = vrot.slane %v240, 6
  %v245 = vadd.f32 %v81, %v243
  %v246 = vtanh.pop %v245
  %v247 = vxor.u32 %v245, 2147483648
  %v248 = vmul.f32 %v247, 1.442695
  %v249 = vpow.pop %v248
  %v250 = vadd.f32 %v249, 1.0
  %v251 = vrcp.pop %v250
  %v252 = vmul.f32 %v250, %v251
  %v253 = vsub.f32 1.0, %v252
  %v254 = vmul.f32 %v251, %v253
  %v255 = vadd.f32 %v251, %v254
  %vm256 = vweird.f32 %v250
  %vm257 = vweird.f32 %v251
  %vm258 = vmor %vm256, %vm257
  %v259 = vsel %vm258, %v251, %v255
  %v260 = vand.u32 2147483647, %v250
  %vm261 = vcmp.eq.f32.partialorder %v260, 8.507059e+37
  %v262 = vand.u32 %v250, 2147483648
  %v263 = vor.u32 1.1754944e-38, %v262
  %v264 = vsel %vm261, %v263, %v259
  %v265 = vmul.f32 1.0, %v264
  %v266 = vsel %vm47, %v246, %v265
  %v268 = vrot.slane %v209, 7
  %v270 = vmul.f32 %v266, %v268
  %272 = vrot.lane.b32.xlu0 %v266, 64
  %v273 = vpop.permute.xlu0 %272
  %v275 = vmul.f32 %v266, %v273
  %277 = vrot.lane.b32.xlu0 %v275, 32
  %v278 = vpop.permute.xlu0 %277
  %v280 = vadd.f32 %v270, %v278
  %v281 = vtanh.pop %v280
  %283 = vrot.lane.b32.xlu0 %v281, 64
  %v284 = vpop.permute.xlu0 %283
  %v286 = vmul.f32 %v266, %v284
  %v288 = vrot.slane %v286, 2
  %289 = vrot.lane.b32.xlu0 %v288, 32
  %v290 = vpop.permute.xlu0 %289
  %v291 = vsel %vm83, %v290, 0
  %293 = vmatpush.msra.mxu0 0.0
  %294 = vmatpush.msra.mxu0 0.0
  %295 = vmatpush.msra.mxu0 0.0
  %296 = vmatpush.msra.mxu0 0.0
  %297 = vmatpush.msra.mxu0 0.0
  %298 = vmatpush.msra.mxu0 0.0
  %299 = vmatpush.msra.mxu0 0.0
  %300 = vmatpush.msra.mxu0 0.0
  %301 = vmatpush.msra.mxu0 0.0
  %302 = vmatpush.msra.mxu0 0.0
  %303 = vmatpush.msra.mxu0 0.0
  %304 = vmatpush.msra.mxu0 0.0
  %305 = vmatpush.msra.mxu0 %v52
  %306 = vmatpush.msra.mxu0 %v51
  %307 = vmatpush.msra.mxu0 %v50
  %308 = vmatpush.msra.mxu0 %v49
  %309 = vmatmul.f32.gmra.mxu0 %v291
  %v310 = vpop.f32.mrf.mxu0
  %v311 = vadd.f32 0.0, %v310
  %312 = vdwg.mxu0
  %v314 = vrot.slane %v311, 5
  %v316 = vadd.f32 %v81, %v314
  %v317 = vtanh.pop %v316
  %v318 = vxor.u32 %v316, 2147483648
  %v319 = vmul.f32 %v318, 1.442695
  %v320 = vpow.pop %v319
  %v321 = vadd.f32 %v320, 1.0
  %v322 = vrcp.pop %v321
  %v323 = vmul.f32 %v321, %v322
  %v324 = vsub.f32 1.0, %v323
  %v325 = vmul.f32 %v322, %v324
  %v326 = vadd.f32 %v322, %v325
  %vm327 = vweird.f32 %v321
  %vm328 = vweird.f32 %v322
  %vm329 = vmor %vm327, %vm328
  %v330 = vsel %vm329, %v322, %v326
  %v331 = vand.u32 2147483647, %v321
  %vm332 = vcmp.eq.f32.partialorder %v331, 8.507059e+37
  %v333 = vand.u32 %v321, 2147483648
  %v334 = vor.u32 1.1754944e-38, %v333
  %v335 = vsel %vm332, %v334, %v330
  %v336 = vmul.f32 1.0, %v335
  %v337 = vsel %vm47, %v317, %v336
  %v339 = vrot.slane %v280, 7
  %v341 = vmul.f32 %v337, %v339
  %343 = vrot.lane.b32.xlu0 %v337, 64
  %v344 = vpop.permute.xlu0 %343
  %v346 = vmul.f32 %v337, %v344
  %348 = vrot.lane.b32.xlu0 %v346, 32
  %v349 = vpop.permute.xlu0 %348
  %v351 = vadd.f32 %v341, %v349
  %v352 = vtanh.pop %v351
  %354 = vrot.lane.b32.xlu0 %v352, 64
  %v355 = vpop.permute.xlu0 %354
  %v357 = vmul.f32 %v337, %v355
  %v359 = vrot.slane %v357, 3
  %360 = vrot.lane.b32.xlu0 %v359, 32
  %v361 = vpop.permute.xlu0 %360
  %v362 = vsel %vm83, %v361, 0
  %364 = vmatpush.msra.mxu0 0.0
  %365 = vmatpush.msra.mxu0 0.0
  %366 = vmatpush.msra.mxu0 0.0
  %367 = vmatpush.msra.mxu0 0.0
  %368 = vmatpush.msra.mxu0 0.0
  %369 = vmatpush.msra.mxu0 0.0
  %370 = vmatpush.msra.mxu0 0.0
  %371 = vmatpush.msra.mxu0 0.0
  %372 = vmatpush.msra.mxu0 0.0
  %373 = vmatpush.msra.mxu0 0.0
  %374 = vmatpush.msra.mxu0 0.0
  %375 = vmatpush.msra.mxu0 0.0
  %376 = vmatpush.msra.mxu0 %v52
  %377 = vmatpush.msra.mxu0 %v51
  %378 = vmatpush.msra.mxu0 %v50
  %379 = vmatpush.msra.mxu0 %v49
  %380 = vmatmul.f32.gmra.mxu0 %v362
  %v381 = vpop.f32.mrf.mxu0
  %v382 = vadd.f32 0.0, %v381
  %383 = vdwg.mxu0
  %v385 = vrot.slane %v382, 4
  %v387 = vadd.f32 %v81, %v385
  %v388 = vtanh.pop %v387
  %v389 = vxor.u32 %v387, 2147483648
  %v390 = vmul.f32 %v389, 1.442695
  %v391 = vpow.pop %v390
  %v392 = vadd.f32 %v391, 1.0
  %v393 = vrcp.pop %v392
  %v394 = vmul.f32 %v392, %v393
  %v395 = vsub.f32 1.0, %v394
  %v396 = vmul.f32 %v393, %v395
  %v397 = vadd.f32 %v393, %v396
  %vm398 = vweird.f32 %v392
  %vm399 = vweird.f32 %v393
  %vm400 = vmor %vm398, %vm399
  %v401 = vsel %vm400, %v393, %v397
  %v402 = vand.u32 2147483647, %v392
  %vm403 = vcmp.eq.f32.partialorder %v402, 8.507059e+37
  %v404 = vand.u32 %v392, 2147483648
  %v405 = vor.u32 1.1754944e-38, %v404
  %v406 = vsel %vm403, %v405, %v401
  %v407 = vmul.f32 1.0, %v406
  %v408 = vsel %vm47, %v388, %v407
  %v410 = vrot.slane %v351, 7
  %v412 = vmul.f32 %v408, %v410
  %414 = vrot.lane.b32.xlu0 %v408, 64
  %v415 = vpop.permute.xlu0 %414
  %v417 = vmul.f32 %v408, %v415
  %419 = vrot.lane.b32.xlu0 %v417, 32
  %v420 = vpop.permute.xlu0 %419
  %v422 = vadd.f32 %v412, %v420
  %v423 = vtanh.pop %v422
  %425 = vrot.lane.b32.xlu0 %v423, 64
  %v426 = vpop.permute.xlu0 %425
  %v428 = vmul.f32 %v408, %v426
  %v430 = vrot.slane %v428, 4
  %431 = vrot.lane.b32.xlu0 %v430, 32
  %v432 = vpop.permute.xlu0 %431
  %v433 = vsel %vm83, %v432, 0
  %435 = vmatpush.msra.mxu0 0.0
  %436 = vmatpush.msra.mxu0 0.0
  %437 = vmatpush.msra.mxu0 0.0
  %438 = vmatpush.msra.mxu0 0.0
  %439 = vmatpush.msra.mxu0 0.0
  %440 = vmatpush.msra.mxu0 0.0
  %441 = vmatpush.msra.mxu0 0.0
  %442 = vmatpush.msra.mxu0 0.0
  %443 = vmatpush.msra.mxu0 0.0
  %444 = vmatpush.msra.mxu0 0.0
  %445 = vmatpush.msra.mxu0 0.0
  %446 = vmatpush.msra.mxu0 0.0
  %447 = vmatpush.msra.mxu0 %v52
  %448 = vmatpush.msra.mxu0 %v51
  %449 = vmatpush.msra.mxu0 %v50
  %450 = vmatpush.msra.mxu0 %v49
  %451 = vmatmul.f32.gmra.mxu0 %v433
  %v452 = vpop.f32.mrf.mxu0
  %v453 = vadd.f32 0.0, %v452
  %454 = vdwg.mxu0
  %v456 = vrot.slane %v453, 3
  %v458 = vadd.f32 %v81, %v456
  %v459 = vtanh.pop %v458
  %v460 = vxor.u32 %v458, 2147483648
  %v461 = vmul.f32 %v460, 1.442695
  %v462 = vpow.pop %v461
  %v463 = vadd.f32 %v462, 1.0
  %v464 = vrcp.pop %v463
  %v465 = vmul.f32 %v463, %v464
  %v466 = vsub.f32 1.0, %v465
  %v467 = vmul.f32 %v464, %v466
  %v468 = vadd.f32 %v464, %v467
  %vm469 = vweird.f32 %v463
  %vm470 = vweird.f32 %v464
  %vm471 = vmor %vm469, %vm470
  %v472 = vsel %vm471, %v464, %v468
  %v473 = vand.u32 2147483647, %v463
  %vm474 = vcmp.eq.f32.partialorder %v473, 8.507059e+37
  %v475 = vand.u32 %v463, 2147483648
  %v476 = vor.u32 1.1754944e-38, %v475
  %v477 = vsel %vm474, %v476, %v472
  %v478 = vmul.f32 1.0, %v477
  %v479 = vsel %vm47, %v459, %v478
  %v481 = vrot.slane %v422, 7
  %v483 = vmul.f32 %v479, %v481
  %485 = vrot.lane.b32.xlu0 %v479, 64
  %v486 = vpop.permute.xlu0 %485
  %v488 = vmul.f32 %v479, %v486
  %490 = vrot.lane.b32.xlu0 %v488, 32
  %v491 = vpop.permute.xlu0 %490
  %v493 = vadd.f32 %v483, %v491
  %v494 = vtanh.pop %v493
  %496 = vrot.lane.b32.xlu0 %v494, 64
  %v497 = vpop.permute.xlu0 %496
  %v499 = vmul.f32 %v479, %v497
  %v501 = vrot.slane %v499, 5
  %502 = vrot.lane.b32.xlu0 %v501, 32
  %v503 = vpop.permute.xlu0 %502
  %v504 = vsel %vm83, %v503, 0
  %506 = vmatpush.msra.mxu0 0.0
  %507 = vmatpush.msra.mxu0 0.0
  %508 = vmatpush.msra.mxu0 0.0
  %509 = vmatpush.msra.mxu0 0.0
  %510 = vmatpush.msra.mxu0 0.0
  %511 = vmatpush.msra.mxu0 0.0
  %512 = vmatpush.msra.mxu0 0.0
  %513 = vmatpush.msra.mxu0 0.0
  %514 = vmatpush.msra.mxu0 0.0
  %515 = vmatpush.msra.mxu0 0.0
  %516 = vmatpush.msra.mxu0 0.0
  %517 = vmatpush.msra.mxu0 0.0
  %518 = vmatpush.msra.mxu0 %v52
  %519 = vmatpush.msra.mxu0 %v51
  %520 = vmatpush.msra.mxu0 %v50
  %521 = vmatpush.msra.mxu0 %v49
  %522 = vmatmul.f32.gmra.mxu0 %v504
  %v523 = vpop.f32.mrf.mxu0
  %v524 = vadd.f32 0.0, %v523
  %525 = vdwg.mxu0
  %v527 = vrot.slane %v524, 2
  %v529 = vadd.f32 %v81, %v527
  %v530 = vtanh.pop %v529
  %v531 = vxor.u32 %v529, 2147483648
  %v532 = vmul.f32 %v531, 1.442695
  %v533 = vpow.pop %v532
  %v534 = vadd.f32 %v533, 1.0
  %v535 = vrcp.pop %v534
  %v536 = vmul.f32 %v534, %v535
  %v537 = vsub.f32 1.0, %v536
  %v538 = vmul.f32 %v535, %v537
  %v539 = vadd.f32 %v535, %v538
  %vm540 = vweird.f32 %v534
  %vm541 = vweird.f32 %v535
  %vm542 = vmor %vm540, %vm541
  %v543 = vsel %vm542, %v535, %v539
  %v544 = vand.u32 2147483647, %v534
  %vm545 = vcmp.eq.f32.partialorder %v544, 8.507059e+37
  %v546 = vand.u32 %v534, 2147483648
  %v547 = vor.u32 1.1754944e-38, %v546
  %v548 = vsel %vm545, %v547, %v543
  %v549 = vmul.f32 1.0, %v548
  %v550 = vsel %vm47, %v530, %v549
  %v552 = vrot.slane %v493, 7
  %v554 = vmul.f32 %v550, %v552
  %556 = vrot.lane.b32.xlu0 %v550, 64
  %v557 = vpop.permute.xlu0 %556
  %v559 = vmul.f32 %v550, %v557
  %561 = vrot.lane.b32.xlu0 %v559, 32
  %v562 = vpop.permute.xlu0 %561
  %v564 = vadd.f32 %v554, %v562
  %v565 = vtanh.pop %v564
  %567 = vrot.lane.b32.xlu0 %v565, 64
  %v568 = vpop.permute.xlu0 %567
  %v570 = vmul.f32 %v550, %v568
  %v572 = vrot.slane %v570, 6
  %573 = vrot.lane.b32.xlu0 %v572, 32
  %v574 = vpop.permute.xlu0 %573
  %v575 = vsel %vm83, %v574, 0
  %577 = vmatpush.msra.mxu0 0.0
  %578 = vmatpush.msra.mxu0 0.0
  %579 = vmatpush.msra.mxu0 0.0
  %580 = vmatpush.msra.mxu0 0.0
  %581 = vmatpush.msra.mxu0 0.0
  %582 = vmatpush.msra.mxu0 0.0
  %583 = vmatpush.msra.mxu0 0.0
  %584 = vmatpush.msra.mxu0 0.0
  %585 = vmatpush.msra.mxu0 0.0
  %586 = vmatpush.msra.mxu0 0.0
  %587 = vmatpush.msra.mxu0 0.0
  %588 = vmatpush.msra.mxu0 0.0
  %589 = vmatpush.msra.mxu0 %v52
  %590 = vmatpush.msra.mxu0 %v51
  %591 = vmatpush.msra.mxu0 %v50
  %592 = vmatpush.msra.mxu0 %v49
  %593 = vmatmul.f32.gmra.mxu0 %v575
  %v594 = vpop.f32.mrf.mxu0
  %v595 = vadd.f32 0.0, %v594
  %596 = vdwg.mxu0
  %v598 = vrot.slane %v595, 1
  %v600 = vadd.f32 %v81, %v598
  %v601 = vtanh.pop %v600
  %v602 = vxor.u32 %v600, 2147483648
  %v603 = vmul.f32 %v602, 1.442695
  %v604 = vpow.pop %v603
  %v605 = vadd.f32 %v604, 1.0
  %v606 = vrcp.pop %v605
  %v607 = vmul.f32 %v605, %v606
  %v608 = vsub.f32 1.0, %v607
  %v609 = vmul.f32 %v606, %v608
  %v610 = vadd.f32 %v606, %v609
  %vm611 = vweird.f32 %v605
  %vm612 = vweird.f32 %v606
  %vm613 = vmor %vm611, %vm612
  %v614 = vsel %vm613, %v606, %v610
  %v615 = vand.u32 2147483647, %v605
  %vm616 = vcmp.eq.f32.partialorder %v615, 8.507059e+37
  %v617 = vand.u32 %v605, 2147483648
  %v618 = vor.u32 1.1754944e-38, %v617
  %v619 = vsel %vm616, %v618, %v614
  %v620 = vmul.f32 1.0, %v619
  %v621 = vsel %vm47, %v601, %v620
  %v623 = vrot.slane %v564, 7
  %v625 = vmul.f32 %v621, %v623
  %627 = vrot.lane.b32.xlu0 %v621, 64
  %v628 = vpop.permute.xlu0 %627
  %v630 = vmul.f32 %v621, %v628
  %632 = vrot.lane.b32.xlu0 %v630, 32
  %v633 = vpop.permute.xlu0 %632
  %v635 = vadd.f32 %v625, %v633
  %v636 = vtanh.pop %v635
  %638 = vrot.lane.b32.xlu0 %v636, 64
  %v639 = vpop.permute.xlu0 %638
  %v641 = vmul.f32 %v621, %v639
  %vm642 = vcmask 1040384
  %v643 = vsel %vm642, %v145, %v215
  %vm644 = vcmask 1041408
  %v645 = vsel %vm644, %v643, %v286
  %vm646 = vcmask 1042432
  %v647 = vsel %vm646, %v645, %v357
  %vm648 = vcmask 1043456
  %v649 = vsel %vm648, %v647, %v428
  %vm650 = vcmask 1044480
  %v651 = vsel %vm650, %v649, %v499
  %vm652 = vcmask 1045504
  %v653 = vsel %vm652, %v651, %v570
  %vm654 = vcmask 1046528
  %v655 = vsel %vm654, %v653, %v641
  %v656 = vld [vmem:[%s5] sm:$0xff]
  %v657 = vld [vmem:[%s5 + $0x8] sm:$0xff]
  %v658 = vld [vmem:[%s5 + $0x10] sm:$0xff]
  %v659 = vld [vmem:[%s5 + $0x18] sm:$0xff]
  %v660 = vld [vmem:[%s4] sm:$0xff]
  %v661 = vld [vmem:[%s4 + $0x8] sm:$0xff]
  %v662 = vld [vmem:[%s4 + $0x10] sm:$0xff]
  %v663 = vld [vmem:[%s4 + $0x18] sm:$0xff]
  %v664 = vld [vmem:[%s6] sm:$0x1]
  %v666 = vperm.slane %v664, 0
  %669 = vrot.lane.b32.xlu0 %v655, 32
  %v670 = vpop.permute.xlu0 %669
  %v671 = vsel %vm83, %v670, 0
  %673 = vmatpush.msra.mxu0 0.0
  %674 = vmatpush.msra.mxu0 0.0
  %675 = vmatpush.msra.mxu0 0.0
  %676 = vmatpush.msra.mxu0 0.0
  %677 = vmatpush.msra.mxu0 0.0
  %678 = vmatpush.msra.mxu0 0.0
  %679 = vmatpush.msra.mxu0 0.0
  %680 = vmatpush.msra.mxu0 0.0
  %681 = vmatpush.msra.mxu0 0.0
  %682 = vmatpush.msra.mxu0 0.0
  %683 = vmatpush.msra.mxu0 0.0
  %684 = vmatpush.msra.mxu0 0.0
  %685 = vmatpush.msra.mxu0 %v663
  %686 = vmatpush.msra.mxu0 %v662
  %687 = vmatpush.msra.mxu0 %v661
  %688 = vmatpush.msra.mxu0 %v660
  %689 = vmatmul.f32.gmra.mxu0 %v671
  %v690 = vpop.f32.mrf.mxu0
  %v691 = vadd.f32 %v666, %v690
  %692 = vdwg.mxu0
  %693 = vmatpush.msra.mxu0 0.0
  %694 = vmatpush.msra.mxu0 0.0
  %695 = vmatpush.msra.mxu0 0.0
  %696 = vmatpush.msra.mxu0 0.0
  %697 = vmatpush.msra.mxu0 0.0
  %698 = vmatpush.msra.mxu0 0.0
  %699 = vmatpush.msra.mxu0 0.0
  %700 = vmatpush.msra.mxu0 0.0
  %701 = vmatpush.msra.mxu0 0.0
  %702 = vmatpush.msra.mxu0 0.0
  %703 = vmatpush.msra.mxu0 0.0
  %704 = vmatpush.msra.mxu0 0.0
  %705 = vmatpush.msra.mxu0 %v659
  %706 = vmatpush.msra.mxu0 %v658
  %707 = vmatpush.msra.mxu0 %v657
  %708 = vmatpush.msra.mxu0 %v656
  %709 = vmatmul.f32.gmra.mxu0 %v85
  %v710 = vpop.f32.mrf.mxu0
  %v711 = vadd.f32 0.0, %v710
  %712 = vdwg.mxu0
  %v713 = vadd.f32 %v691, %v711
  %v714 = vtanh.pop %v713
  %v715 = vxor.u32 %v713, 2147483648
  %v716 = vmul.f32 %v715, 1.442695
  %v717 = vpow.pop %v716
  %v718 = vadd.f32 %v717, 1.0
  %v719 = vrcp.pop %v718
  %v720 = vmul.f32 %v718, %v719
  %v721 = vsub.f32 1.0, %v720
  %v722 = vmul.f32 %v719, %v721
  %v723 = vadd.f32 %v719, %v722
  %vm724 = vweird.f32 %v718
  %vm725 = vweird.f32 %v719
  %vm726 = vmor %vm724, %vm725
  %v727 = vsel %vm726, %v719, %v723
  %v728 = vand.u32 2147483647, %v718
  %vm729 = vcmp.eq.f32.partialorder %v728, 8.507059e+37
  %v730 = vand.u32 %v718, 2147483648
  %v731 = vor.u32 1.1754944e-38, %v730
  %v732 = vsel %vm729, %v731, %v727
  %v733 = vmul.f32 1.0, %v732
  %v734 = vsel %vm47, %v714, %v733
  %v735 = vmul.f32 %v734, 0.0
  %737 = vrot.lane.b32.xlu0 %v734, 64
  %v738 = vpop.permute.xlu0 %737
  %v740 = vmul.f32 %v734, %v738
  %742 = vrot.lane.b32.xlu0 %v740, 32
  %v743 = vpop.permute.xlu0 %742
  %v745 = vadd.f32 %v735, %v743
  %v746 = vtanh.pop %v745
  %748 = vrot.lane.b32.xlu0 %v746, 64
  %v749 = vpop.permute.xlu0 %748
  %v751 = vmul.f32 %v734, %v749
  %753 = vrot.lane.b32.xlu0 %v751, 32
  %v754 = vpop.permute.xlu0 %753
  %v755 = vsel %vm83, %v754, 0
  %757 = vmatpush.msra.mxu0 0.0
  %758 = vmatpush.msra.mxu0 0.0
  %759 = vmatpush.msra.mxu0 0.0
  %760 = vmatpush.msra.mxu0 0.0
  %761 = vmatpush.msra.mxu0 0.0
  %762 = vmatpush.msra.mxu0 0.0
  %763 = vmatpush.msra.mxu0 0.0
  %764 = vmatpush.msra.mxu0 0.0
  %765 = vmatpush.msra.mxu0 0.0
  %766 = vmatpush.msra.mxu0 0.0
  %767 = vmatpush.msra.mxu0 0.0
  %768 = vmatpush.msra.mxu0 0.0
  %769 = vmatpush.msra.mxu0 %v659
  %770 = vmatpush.msra.mxu0 %v658
  %771 = vmatpush.msra.mxu0 %v657
  %772 = vmatpush.msra.mxu0 %v656
  %773 = vmatmul.f32.gmra.mxu0 %v755
  %v774 = vpop.f32.mrf.mxu0
  %v775 = vadd.f32 0.0, %v774
  %776 = vdwg.mxu0
  %v778 = vrot.slane %v775, 7
  %v780 = vadd.f32 %v691, %v778
  %v781 = vtanh.pop %v780
  %v782 = vxor.u32 %v780, 2147483648
  %v783 = vmul.f32 %v782, 1.442695
  %v784 = vpow.pop %v783
  %v785 = vadd.f32 %v784, 1.0
  %v786 = vrcp.pop %v785
  %v787 = vmul.f32 %v785, %v786
  %v788 = vsub.f32 1.0, %v787
  %v789 = vmul.f32 %v786, %v788
  %v790 = vadd.f32 %v786, %v789
  %vm791 = vweird.f32 %v785
  %vm792 = vweird.f32 %v786
  %vm793 = vmor %vm791, %vm792
  %v794 = vsel %vm793, %v786, %v790
  %v795 = vand.u32 2147483647, %v785
  %vm796 = vcmp.eq.f32.partialorder %v795, 8.507059e+37
  %v797 = vand.u32 %v785, 2147483648
  %v798 = vor.u32 1.1754944e-38, %v797
  %v799 = vsel %vm796, %v798, %v794
  %v800 = vmul.f32 1.0, %v799
  %v801 = vsel %vm47, %v781, %v800
  %v803 = vrot.slane %v745, 7
  %v805 = vmul.f32 %v801, %v803
  %807 = vrot.lane.b32.xlu0 %v801, 64
  %v808 = vpop.permute.xlu0 %807
  %v810 = vmul.f32 %v801, %v808
  %812 = vrot.lane.b32.xlu0 %v810, 32
  %v813 = vpop.permute.xlu0 %812
  %v815 = vadd.f32 %v805, %v813
  %v816 = vtanh.pop %v815
  %818 = vrot.lane.b32.xlu0 %v816, 64
  %v819 = vpop.permute.xlu0 %818
  %v821 = vmul.f32 %v801, %v819
  %v823 = vrot.slane %v821, 1
  %824 = vrot.lane.b32.xlu0 %v823, 32
  %v825 = vpop.permute.xlu0 %824
  %v826 = vsel %vm83, %v825, 0
  %828 = vmatpush.msra.mxu0 0.0
  %829 = vmatpush.msra.mxu0 0.0
  %830 = vmatpush.msra.mxu0 0.0
  %831 = vmatpush.msra.mxu0 0.0
  %832 = vmatpush.msra.mxu0 0.0
  %833 = vmatpush.msra.mxu0 0.0
  %834 = vmatpush.msra.mxu0 0.0
  %835 = vmatpush.msra.mxu0 0.0
  %836 = vmatpush.msra.mxu0 0.0
  %837 = vmatpush.msra.mxu0 0.0
  %838 = vmatpush.msra.mxu0 0.0
  %839 = vmatpush.msra.mxu0 0.0
  %840 = vmatpush.msra.mxu0 %v659
  %841 = vmatpush.msra.mxu0 %v658
  %842 = vmatpush.msra.mxu0 %v657
  %843 = vmatpush.msra.mxu0 %v656
  %844 = vmatmul.f32.gmra.mxu0 %v826
  %v845 = vpop.f32.mrf.mxu0
  %v846 = vadd.f32 0.0, %v845
  %847 = vdwg.mxu0
  %v849 = vrot.slane %v846, 6
  %v851 = vadd.f32 %v691, %v849
  %v852 = vtanh.pop %v851
  %v853 = vxor.u32 %v851, 2147483648
  %v854 = vmul.f32 %v853, 1.442695
  %v855 = vpow.pop %v854
  %v856 = vadd.f32 %v855, 1.0
  %v857 = vrcp.pop %v856
  %v858 = vmul.f32 %v856, %v857
  %v859 = vsub.f32 1.0, %v858
  %v860 = vmul.f32 %v857, %v859
  %v861 = vadd.f32 %v857, %v860
  %vm862 = vweird.f32 %v856
  %vm863 = vweird.f32 %v857
  %vm864 = vmor %vm862, %vm863
  %v865 = vsel %vm864, %v857, %v861
  %v866 = vand.u32 2147483647, %v856
  %vm867 = vcmp.eq.f32.partialorder %v866, 8.507059e+37
  %v868 = vand.u32 %v856, 2147483648
  %v869 = vor.u32 1.1754944e-38, %v868
  %v870 = vsel %vm867, %v869, %v865
  %v871 = vmul.f32 1.0, %v870
  %v872 = vsel %vm47, %v852, %v871
  %v874 = vrot.slane %v815, 7
  %v876 = vmul.f32 %v872, %v874
  %878 = vrot.lane.b32.xlu0 %v872, 64
  %v879 = vpop.permute.xlu0 %878
  %v881 = vmul.f32 %v872, %v879
  %883 = vrot.lane.b32.xlu0 %v881, 32
  %v884 = vpop.permute.xlu0 %883
  %v886 = vadd.f32 %v876, %v884
  %v887 = vtanh.pop %v886
  %889 = vrot.lane.b32.xlu0 %v887, 64
  %v890 = vpop.permute.xlu0 %889
  %v892 = vmul.f32 %v872, %v890
  %v894 = vrot.slane %v892, 2
  %895 = vrot.lane.b32.xlu0 %v894, 32
  %v896 = vpop.permute.xlu0 %895
  %v897 = vsel %vm83, %v896, 0
  %899 = vmatpush.msra.mxu0 0.0
  %900 = vmatpush.msra.mxu0 0.0
  %901 = vmatpush.msra.mxu0 0.0
  %902 = vmatpush.msra.mxu0 0.0
  %903 = vmatpush.msra.mxu0 0.0
  %904 = vmatpush.msra.mxu0 0.0
  %905 = vmatpush.msra.mxu0 0.0
  %906 = vmatpush.msra.mxu0 0.0
  %907 = vmatpush.msra.mxu0 0.0
  %908 = vmatpush.msra.mxu0 0.0
  %909 = vmatpush.msra.mxu0 0.0
  %910 = vmatpush.msra.mxu0 0.0
  %911 = vmatpush.msra.mxu0 %v659
  %912 = vmatpush.msra.mxu0 %v658
  %913 = vmatpush.msra.mxu0 %v657
  %914 = vmatpush.msra.mxu0 %v656
  %915 = vmatmul.f32.gmra.mxu0 %v897
  %v916 = vpop.f32.mrf.mxu0
  %v917 = vadd.f32 0.0, %v916
  %918 = vdwg.mxu0
  %v920 = vrot.slane %v917, 5
  %v922 = vadd.f32 %v691, %v920
  %v923 = vtanh.pop %v922
  %v924 = vxor.u32 %v922, 2147483648
  %v925 = vmul.f32 %v924, 1.442695
  %v926 = vpow.pop %v925
  %v927 = vadd.f32 %v926, 1.0
  %v928 = vrcp.pop %v927
  %v929 = vmul.f32 %v927, %v928
  %v930 = vsub.f32 1.0, %v929
  %v931 = vmul.f32 %v928, %v930
  %v932 = vadd.f32 %v928, %v931
  %vm933 = vweird.f32 %v927
  %vm934 = vweird.f32 %v928
  %vm935 = vmor %vm933, %vm934
  %v936 = vsel %vm935, %v928, %v932
  %v937 = vand.u32 2147483647, %v927
  %vm938 = vcmp.eq.f32.partialorder %v937, 8.507059e+37
  %v939 = vand.u32 %v927, 2147483648
  %v940 = vor.u32 1.1754944e-38, %v939
  %v941 = vsel %vm938, %v940, %v936
  %v942 = vmul.f32 1.0, %v941
  %v943 = vsel %vm47, %v923, %v942
  %v945 = vrot.slane %v886, 7
  %v947 = vmul.f32 %v943, %v945
  %949 = vrot.lane.b32.xlu0 %v943, 64
  %v950 = vpop.permute.xlu0 %949
  %v952 = vmul.f32 %v943, %v950
  %954 = vrot.lane.b32.xlu0 %v952, 32
  %v955 = vpop.permute.xlu0 %954
  %v957 = vadd.f32 %v947, %v955
  %v958 = vtanh.pop %v957
  %960 = vrot.lane.b32.xlu0 %v958, 64
  %v961 = vpop.permute.xlu0 %960
  %v963 = vmul.f32 %v943, %v961
  %v965 = vrot.slane %v963, 3
  %966 = vrot.lane.b32.xlu0 %v965, 32
  %v967 = vpop.permute.xlu0 %966
  %v968 = vsel %vm83, %v967, 0
  %970 = vmatpush.msra.mxu0 0.0
  %971 = vmatpush.msra.mxu0 0.0
  %972 = vmatpush.msra.mxu0 0.0
  %973 = vmatpush.msra.mxu0 0.0
  %974 = vmatpush.msra.mxu0 0.0
  %975 = vmatpush.msra.mxu0 0.0
  %976 = vmatpush.msra.mxu0 0.0
  %977 = vmatpush.msra.mxu0 0.0
  %978 = vmatpush.msra.mxu0 0.0
  %979 = vmatpush.msra.mxu0 0.0
  %980 = vmatpush.msra.mxu0 0.0
  %981 = vmatpush.msra.mxu0 0.0
  %982 = vmatpush.msra.mxu0 %v659
  %983 = vmatpush.msra.mxu0 %v658
  %984 = vmatpush.msra.mxu0 %v657
  %985 = vmatpush.msra.mxu0 %v656
  %986 = vmatmul.f32.gmra.mxu0 %v968
  %v987 = vpop.f32.mrf.mxu0
  %v988 = vadd.f32 0.0, %v987
  %989 = vdwg.mxu0
  %v991 = vrot.slane %v988, 4
  %v993 = vadd.f32 %v691, %v991
  %v994 = vtanh.pop %v993
  %v995 = vxor.u32 %v993, 2147483648
  %v996 = vmul.f32 %v995, 1.442695
  %v997 = vpow.pop %v996
  %v998 = vadd.f32 %v997, 1.0
  %v999 = vrcp.pop %v998
  %v1000 = vmul.f32 %v998, %v999
  %v1001 = vsub.f32 1.0, %v1000
  %v1002 = vmul.f32 %v999, %v1001
  %v1003 = vadd.f32 %v999, %v1002
  %vm1004 = vweird.f32 %v998
  %vm1005 = vweird.f32 %v999
  %vm1006 = vmor %vm1004, %vm1005
  %v1007 = vsel %vm1006, %v999, %v1003
  %v1008 = vand.u32 2147483647, %v998
  %vm1009 = vcmp.eq.f32.partialorder %v1008, 8.507059e+37
  %v1010 = vand.u32 %v998, 2147483648
  %v1011 = vor.u32 1.1754944e-38, %v1010
  %v1012 = vsel %vm1009, %v1011, %v1007
  %v1013 = vmul.f32 1.0, %v1012
  %v1014 = vsel %vm47, %v994, %v1013
  %v1016 = vrot.slane %v957, 7
  %v1018 = vmul.f32 %v1014, %v1016
  %1020 = vrot.lane.b32.xlu0 %v1014, 64
  %v1021 = vpop.permute.xlu0 %1020
  %v1023 = vmul.f32 %v1014, %v1021
  %1025 = vrot.lane.b32.xlu0 %v1023, 32
  %v1026 = vpop.permute.xlu0 %1025
  %v1028 = vadd.f32 %v1018, %v1026
  %v1029 = vtanh.pop %v1028
  %1031 = vrot.lane.b32.xlu0 %v1029, 64
  %v1032 = vpop.permute.xlu0 %1031
  %v1034 = vmul.f32 %v1014, %v1032
  %v1036 = vrot.slane %v1034, 4
  %1037 = vrot.lane.b32.xlu0 %v1036, 32
  %v1038 = vpop.permute.xlu0 %1037
  %v1039 = vsel %vm83, %v1038, 0
  %1041 = vmatpush.msra.mxu0 0.0
  %1042 = vmatpush.msra.mxu0 0.0
  %1043 = vmatpush.msra.mxu0 0.0
  %1044 = vmatpush.msra.mxu0 0.0
  %1045 = vmatpush.msra.mxu0 0.0
  %1046 = vmatpush.msra.mxu0 0.0
  %1047 = vmatpush.msra.mxu0 0.0
  %1048 = vmatpush.msra.mxu0 0.0
  %1049 = vmatpush.msra.mxu0 0.0
  %1050 = vmatpush.msra.mxu0 0.0
  %1051 = vmatpush.msra.mxu0 0.0
  %1052 = vmatpush.msra.mxu0 0.0
  %1053 = vmatpush.msra.mxu0 %v659
  %1054 = vmatpush.msra.mxu0 %v658
  %1055 = vmatpush.msra.mxu0 %v657
  %1056 = vmatpush.msra.mxu0 %v656
  %1057 = vmatmul.f32.gmra.mxu0 %v1039
  %v1058 = vpop.f32.mrf.mxu0
  %v1059 = vadd.f32 0.0, %v1058
  %1060 = vdwg.mxu0
  %v1062 = vrot.slane %v1059, 3
  %v1064 = vadd.f32 %v691, %v1062
  %v1065 = vtanh.pop %v1064
  %v1066 = vxor.u32 %v1064, 2147483648
  %v1067 = vmul.f32 %v1066, 1.442695
  %v1068 = vpow.pop %v1067
  %v1069 = vadd.f32 %v1068, 1.0
  %v1070 = vrcp.pop %v1069
  %v1071 = vmul.f32 %v1069, %v1070
  %v1072 = vsub.f32 1.0, %v1071
  %v1073 = vmul.f32 %v1070, %v1072
  %v1074 = vadd.f32 %v1070, %v1073
  %vm1075 = vweird.f32 %v1069
  %vm1076 = vweird.f32 %v1070
  %vm1077 = vmor %vm1075, %vm1076
  %v1078 = vsel %vm1077, %v1070, %v1074
  %v1079 = vand.u32 2147483647, %v1069
  %vm1080 = vcmp.eq.f32.partialorder %v1079, 8.507059e+37
  %v1081 = vand.u32 %v1069, 2147483648
  %v1082 = vor.u32 1.1754944e-38, %v1081
  %v1083 = vsel %vm1080, %v1082, %v1078
  %v1084 = vmul.f32 1.0, %v1083
  %v1085 = vsel %vm47, %v1065, %v1084
  %v1087 = vrot.slane %v1028, 7
  %v1089 = vmul.f32 %v1085, %v1087
  %1091 = vrot.lane.b32.xlu0 %v1085, 64
  %v1092 = vpop.permute.xlu0 %1091
  %v1094 = vmul.f32 %v1085, %v1092
  %1096 = vrot.lane.b32.xlu0 %v1094, 32
  %v1097 = vpop.permute.xlu0 %1096
  %v1099 = vadd.f32 %v1089, %v1097
  %v1100 = vtanh.pop %v1099
  %1102 = vrot.lane.b32.xlu0 %v1100, 64
  %v1103 = vpop.permute.xlu0 %1102
  %v1105 = vmul.f32 %v1085, %v1103
  %v1107 = vrot.slane %v1105, 5
  %1108 = vrot.lane.b32.xlu0 %v1107, 32
  %v1109 = vpop.permute.xlu0 %1108
  %v1110 = vsel %vm83, %v1109, 0
  %1112 = vmatpush.msra.mxu0 0.0
  %1113 = vmatpush.msra.mxu0 0.0
  %1114 = vmatpush.msra.mxu0 0.0
  %1115 = vmatpush.msra.mxu0 0.0
  %1116 = vmatpush.msra.mxu0 0.0
  %1117 = vmatpush.msra.mxu0 0.0
  %1118 = vmatpush.msra.mxu0 0.0
  %1119 = vmatpush.msra.mxu0 0.0
  %1120 = vmatpush.msra.mxu0 0.0
  %1121 = vmatpush.msra.mxu0 0.0
  %1122 = vmatpush.msra.mxu0 0.0
  %1123 = vmatpush.msra.mxu0 0.0
  %1124 = vmatpush.msra.mxu0 %v659
  %1125 = vmatpush.msra.mxu0 %v658
  %1126 = vmatpush.msra.mxu0 %v657
  %1127 = vmatpush.msra.mxu0 %v656
  %1128 = vmatmul.f32.gmra.mxu0 %v1110
  %v1129 = vpop.f32.mrf.mxu0
  %v1130 = vadd.f32 0.0, %v1129
  %1131 = vdwg.mxu0
  %v1133 = vrot.slane %v1130, 2
  %v1135 = vadd.f32 %v691, %v1133
  %v1136 = vtanh.pop %v1135
  %v1137 = vxor.u32 %v1135, 2147483648
  %v1138 = vmul.f32 %v1137, 1.442695
  %v1139 = vpow.pop %v1138
  %v1140 = vadd.f32 %v1139, 1.0
  %v1141 = vrcp.pop %v1140
  %v1142 = vmul.f32 %v1140, %v1141
  %v1143 = vsub.f32 1.0, %v1142
  %v1144 = vmul.f32 %v1141, %v1143
  %v1145 = vadd.f32 %v1141, %v1144
  %vm1146 = vweird.f32 %v1140
  %vm1147 = vweird.f32 %v1141
  %vm1148 = vmor %vm1146, %vm1147
  %v1149 = vsel %vm1148, %v1141, %v1145
  %v1150 = vand.u32 2147483647, %v1140
  %vm1151 = vcmp.eq.f32.partialorder %v1150, 8.507059e+37
  %v1152 = vand.u32 %v1140, 2147483648
  %v1153 = vor.u32 1.1754944e-38, %v1152
  %v1154 = vsel %vm1151, %v1153, %v1149
  %v1155 = vmul.f32 1.0, %v1154
  %v1156 = vsel %vm47, %v1136, %v1155
  %v1158 = vrot.slane %v1099, 7
  %v1160 = vmul.f32 %v1156, %v1158
  %1162 = vrot.lane.b32.xlu0 %v1156, 64
  %v1163 = vpop.permute.xlu0 %1162
  %v1165 = vmul.f32 %v1156, %v1163
  %1167 = vrot.lane.b32.xlu0 %v1165, 32
  %v1168 = vpop.permute.xlu0 %1167
  %v1170 = vadd.f32 %v1160, %v1168
  %v1171 = vtanh.pop %v1170
  %1173 = vrot.lane.b32.xlu0 %v1171, 64
  %v1174 = vpop.permute.xlu0 %1173
  %v1176 = vmul.f32 %v1156, %v1174
  %v1178 = vrot.slane %v1176, 6
  %1179 = vrot.lane.b32.xlu0 %v1178, 32
  %v1180 = vpop.permute.xlu0 %1179
  %v1181 = vsel %vm83, %v1180, 0
  %1183 = vmatpush.msra.mxu0 0.0
  %1184 = vmatpush.msra.mxu0 0.0
  %1185 = vmatpush.msra.mxu0 0.0
  %1186 = vmatpush.msra.mxu0 0.0
  %1187 = vmatpush.msra.mxu0 0.0
  %1188 = vmatpush.msra.mxu0 0.0
  %1189 = vmatpush.msra.mxu0 0.0
  %1190 = vmatpush.msra.mxu0 0.0
  %1191 = vmatpush.msra.mxu0 0.0
  %1192 = vmatpush.msra.mxu0 0.0
  %1193 = vmatpush.msra.mxu0 0.0
  %1194 = vmatpush.msra.mxu0 0.0
  %1195 = vmatpush.msra.mxu0 %v659
  %1196 = vmatpush.msra.mxu0 %v658
  %1197 = vmatpush.msra.mxu0 %v657
  %1198 = vmatpush.msra.mxu0 %v656
  %1199 = vmatmul.f32.gmra.mxu0 %v1181
  %v1200 = vpop.f32.mrf.mxu0
  %v1201 = vadd.f32 0.0, %v1200
  %1202 = vdwg.mxu0
  %v1204 = vrot.slane %v1201, 1
  %v1206 = vadd.f32 %v691, %v1204
  %v1207 = vtanh.pop %v1206
  %v1208 = vxor.u32 %v1206, 2147483648
  %v1209 = vmul.f32 %v1208, 1.442695
  %v1210 = vpow.pop %v1209
  %v1211 = vadd.f32 %v1210, 1.0
  %v1212 = vrcp.pop %v1211
  %v1213 = vmul.f32 %v1211, %v1212
  %v1214 = vsub.f32 1.0, %v1213
  %v1215 = vmul.f32 %v1212, %v1214
  %v1216 = vadd.f32 %v1212, %v1215
  %vm1217 = vweird.f32 %v1211
  %vm1218 = vweird.f32 %v1212
  %vm1219 = vmor %vm1217, %vm1218
  %v1220 = vsel %vm1219, %v1212, %v1216
  %v1221 = vand.u32 2147483647, %v1211
  %vm1222 = vcmp.eq.f32.partialorder %v1221, 8.507059e+37
  %v1223 = vand.u32 %v1211, 2147483648
  %v1224 = vor.u32 1.1754944e-38, %v1223
  %v1225 = vsel %vm1222, %v1224, %v1220
  %v1226 = vmul.f32 1.0, %v1225
  %v1227 = vsel %vm47, %v1207, %v1226
  %v1229 = vrot.slane %v1170, 7
  %v1231 = vmul.f32 %v1227, %v1229
  %1233 = vrot.lane.b32.xlu0 %v1227, 64
  %v1234 = vpop.permute.xlu0 %1233
  %v1236 = vmul.f32 %v1227, %v1234
  %1238 = vrot.lane.b32.xlu0 %v1236, 32
  %v1239 = vpop.permute.xlu0 %1238
  %v1241 = vadd.f32 %v1231, %v1239
  %v1242 = vtanh.pop %v1241
  %1244 = vrot.lane.b32.xlu0 %v1242, 64
  %v1245 = vpop.permute.xlu0 %1244
  %v1247 = vmul.f32 %v1227, %v1245
  %v1248 = vsel %vm642, %v751, %v821
  %v1249 = vsel %vm644, %v1248, %v892
  %v1250 = vsel %vm646, %v1249, %v963
  %v1251 = vsel %vm648, %v1250, %v1034
  %v1252 = vsel %vm650, %v1251, %v1105
  %v1253 = vsel %vm652, %v1252, %v1176
  %v1254 = vsel %vm654, %v1253, %v1247
  %v1255 = vld [vmem:[%s7] sm:$0xff]
  %v1256 = vld [vmem:[%s7 + $0x8] sm:$0xff]
  %v1257 = vld [vmem:[%s7 + $0x10] sm:$0xff]
  %v1258 = vld [vmem:[%s7 + $0x18] sm:$0xff]
  %v1259 = vld [vmem:[%s7 + $0x20] sm:$0xff]
  %v1260 = vld [vmem:[%s7 + $0x28] sm:$0xff]
  %v1261 = vld [vmem:[%s7 + $0x30] sm:$0xff]
  %v1262 = vld [vmem:[%s7 + $0x38] sm:$0xff]
  %v1263 = vld [vmem:[%s7 + $0x40] sm:$0xff]
  %v1264 = vld [vmem:[%s7 + $0x48] sm:$0xff]
  %v1265 = vld [vmem:[%s7 + $0x50] sm:$0xff]
  %v1266 = vld [vmem:[%s7 + $0x58] sm:$0xff]
  %v1267 = vld [vmem:[%s7 + $0x60] sm:$0xff]
  %v1268 = vld [vmem:[%s7 + $0x68] sm:$0xff]
  %v1269 = vld [vmem:[%s7 + $0x70] sm:$0xff]
  %v1270 = vld [vmem:[%s7 + $0x78] sm:$0xff]
  %v1271 = vld [vmem:[%s7 + $0x80] sm:$0xff]
  %v1272 = vld [vmem:[%s7 + $0x88] sm:$0xff]
  %v1273 = vld [vmem:[%s7 + $0x90] sm:$0xff]
  %v1274 = vld [vmem:[%s7 + $0x98] sm:$0xff]
  %v1275 = vld [vmem:[%s7 + $0xa0] sm:$0xff]
  %v1276 = vld [vmem:[%s7 + $0xa8] sm:$0xff]
  %v1277 = vld [vmem:[%s7 + $0xb0] sm:$0xff]
  %v1278 = vld [vmem:[%s7 + $0xb8] sm:$0xff]
  %v1279 = vld [vmem:[%s7 + $0xc0] sm:$0xff]
  %v1280 = vld [vmem:[%s7 + $0xc8] sm:$0xff]
  %v1281 = vld [vmem:[%s7 + $0xd0] sm:$0xff]
  %v1282 = vld [vmem:[%s7 + $0xd8] sm:$0xff]
  %v1283 = vld [vmem:[%s7 + $0xe0] sm:$0xff]
  %v1284 = vld [vmem:[%s7 + $0xe8] sm:$0xff]
  %v1285 = vld [vmem:[%s7 + $0xf0] sm:$0xff]
  %v1286 = vld [vmem:[%s7 + $0xf8] sm:$0xff]
  %v1287 = vld [vmem:[%s8] sm:$0xff]
  %v1289 = vperm.slane %v1287, 0
  %v1290 = vperm.slane %v1287, 1
  %v1291 = vperm.slane %v1287, 2
  %v1292 = vperm.slane %v1287, 3
  %v1293 = vperm.slane %v1287, 4
  %v1294 = vperm.slane %v1287, 5
  %v1295 = vperm.slane %v1287, 6
  %v1296 = vperm.slane %v1287, 7
  %1306 = vrot.lane.b32.xlu0 %v1254, 32
  %v1307 = vpop.permute.xlu0 %1306
  %v1308 = vsel %vm83, %v1307, 0
  %1310 = vmatpush.msra.mxu0 0.0
  %1311 = vmatpush.msra.mxu0 0.0
  %1312 = vmatpush.msra.mxu0 0.0
  %1313 = vmatpush.msra.mxu0 0.0
  %1314 = vmatpush.msra.mxu0 0.0
  %1315 = vmatpush.msra.mxu0 0.0
  %1316 = vmatpush.msra.mxu0 0.0
  %1317 = vmatpush.msra.mxu0 0.0
  %1318 = vmatpush.msra.mxu0 0.0
  %1319 = vmatpush.msra.mxu0 0.0
  %1320 = vmatpush.msra.mxu0 0.0
  %1321 = vmatpush.msra.mxu0 0.0
  %1322 = vmatpush.msra.mxu0 %v1279
  %1323 = vmatpush.msra.mxu0 %v1271
  %1324 = vmatpush.msra.mxu0 %v1263
  %1325 = vmatpush.msra.mxu0 %v1255
  %1326 = vmatmul.f32.gmra.mxu0 %v1308
  %v1327 = vpop.f32.mrf.mxu0
  %v1328 = vadd.f32 %v1289, %v1327
  %1329 = vdwg.mxu0
  %1330 = vmatpush.msra.mxu0 0.0
  %1331 = vmatpush.msra.mxu0 0.0
  %1332 = vmatpush.msra.mxu0 0.0
  %1333 = vmatpush.msra.mxu0 0.0
  %1334 = vmatpush.msra.mxu0 0.0
  %1335 = vmatpush.msra.mxu0 0.0
  %1336 = vmatpush.msra.mxu0 0.0
  %1337 = vmatpush.msra.mxu0 0.0
  %1338 = vmatpush.msra.mxu0 0.0
  %1339 = vmatpush.msra.mxu0 0.0
  %1340 = vmatpush.msra.mxu0 0.0
  %1341 = vmatpush.msra.mxu0 0.0
  %1342 = vmatpush.msra.mxu0 %v1280
  %1343 = vmatpush.msra.mxu0 %v1272
  %1344 = vmatpush.msra.mxu0 %v1264
  %1345 = vmatpush.msra.mxu0 %v1256
  %1346 = vmatmul.f32.gmra.mxu0 %v1308
  %v1347 = vpop.f32.mrf.mxu0
  %v1348 = vadd.f32 %v1290, %v1347
  %1349 = vdwg.mxu0
  %1350 = vmatpush.msra.mxu0 0.0
  %1351 = vmatpush.msra.mxu0 0.0
  %1352 = vmatpush.msra.mxu0 0.0
  %1353 = vmatpush.msra.mxu0 0.0
  %1354 = vmatpush.msra.mxu0 0.0
  %1355 = vmatpush.msra.mxu0 0.0
  %1356 = vmatpush.msra.mxu0 0.0
  %1357 = vmatpush.msra.mxu0 0.0
  %1358 = vmatpush.msra.mxu0 0.0
  %1359 = vmatpush.msra.mxu0 0.0
  %1360 = vmatpush.msra.mxu0 0.0
  %1361 = vmatpush.msra.mxu0 0.0
  %1362 = vmatpush.msra.mxu0 %v1281
  %1363 = vmatpush.msra.mxu0 %v1273
  %1364 = vmatpush.msra.mxu0 %v1265
  %1365 = vmatpush.msra.mxu0 %v1257
  %1366 = vmatmul.f32.gmra.mxu0 %v1308
  %v1367 = vpop.f32.mrf.mxu0
  %v1368 = vadd.f32 %v1291, %v1367
  %1369 = vdwg.mxu0
  %1370 = vmatpush.msra.mxu0 0.0
  %1371 = vmatpush.msra.mxu0 0.0
  %1372 = vmatpush.msra.mxu0 0.0
  %1373 = vmatpush.msra.mxu0 0.0
  %1374 = vmatpush.msra.mxu0 0.0
  %1375 = vmatpush.msra.mxu0 0.0
  %1376 = vmatpush.msra.mxu0 0.0
  %1377 = vmatpush.msra.mxu0 0.0
  %1378 = vmatpush.msra.mxu0 0.0
  %1379 = vmatpush.msra.mxu0 0.0
  %1380 = vmatpush.msra.mxu0 0.0
  %1381 = vmatpush.msra.mxu0 0.0
  %1382 = vmatpush.msra.mxu0 %v1282
  %1383 = vmatpush.msra.mxu0 %v1274
  %1384 = vmatpush.msra.mxu0 %v1266
  %1385 = vmatpush.msra.mxu0 %v1258
  %1386 = vmatmul.f32.gmra.mxu0 %v1308
  %v1387 = vpop.f32.mrf.mxu0
  %v1388 = vadd.f32 %v1292, %v1387
  %1389 = vdwg.mxu0
  %1390 = vmatpush.msra.mxu0 0.0
  %1391 = vmatpush.msra.mxu0 0.0
  %1392 = vmatpush.msra.mxu0 0.0
  %1393 = vmatpush.msra.mxu0 0.0
  %1394 = vmatpush.msra.mxu0 0.0
  %1395 = vmatpush.msra.mxu0 0.0
  %1396 = vmatpush.msra.mxu0 0.0
  %1397 = vmatpush.msra.mxu0 0.0
  %1398 = vmatpush.msra.mxu0 0.0
  %1399 = vmatpush.msra.mxu0 0.0
  %1400 = vmatpush.msra.mxu0 0.0
  %1401 = vmatpush.msra.mxu0 0.0
  %1402 = vmatpush.msra.mxu0 %v1283
  %1403 = vmatpush.msra.mxu0 %v1275
  %1404 = vmatpush.msra.mxu0 %v1267
  %1405 = vmatpush.msra.mxu0 %v1259
  %1406 = vmatmul.f32.gmra.mxu0 %v1308
  %v1407 = vpop.f32.mrf.mxu0
  %v1408 = vadd.f32 %v1293, %v1407
  %1409 = vdwg.mxu0
  %1410 = vmatpush.msra.mxu0 0.0
  %1411 = vmatpush.msra.mxu0 0.0
  %1412 = vmatpush.msra.mxu0 0.0
  %1413 = vmatpush.msra.mxu0 0.0
  %1414 = vmatpush.msra.mxu0 0.0
  %1415 = vmatpush.msra.mxu0 0.0
  %1416 = vmatpush.msra.mxu0 0.0
  %1417 = vmatpush.msra.mxu0 0.0
  %1418 = vmatpush.msra.mxu0 0.0
  %1419 = vmatpush.msra.mxu0 0.0
  %1420 = vmatpush.msra.mxu0 0.0
  %1421 = vmatpush.msra.mxu0 0.0
  %1422 = vmatpush.msra.mxu0 %v1284
  %1423 = vmatpush.msra.mxu0 %v1276
  %1424 = vmatpush.msra.mxu0 %v1268
  %1425 = vmatpush.msra.mxu0 %v1260
  %1426 = vmatmul.f32.gmra.mxu0 %v1308
  %v1427 = vpop.f32.mrf.mxu0
  %v1428 = vadd.f32 %v1294, %v1427
  %1429 = vdwg.mxu0
  %1430 = vmatpush.msra.mxu0 0.0
  %1431 = vmatpush.msra.mxu0 0.0
  %1432 = vmatpush.msra.mxu0 0.0
  %1433 = vmatpush.msra.mxu0 0.0
  %1434 = vmatpush.msra.mxu0 0.0
  %1435 = vmatpush.msra.mxu0 0.0
  %1436 = vmatpush.msra.mxu0 0.0
  %1437 = vmatpush.msra.mxu0 0.0
  %1438 = vmatpush.msra.mxu0 0.0
  %1439 = vmatpush.msra.mxu0 0.0
  %1440 = vmatpush.msra.mxu0 0.0
  %1441 = vmatpush.msra.mxu0 0.0
  %1442 = vmatpush.msra.mxu0 %v1285
  %1443 = vmatpush.msra.mxu0 %v1277
  %1444 = vmatpush.msra.mxu0 %v1269
  %1445 = vmatpush.msra.mxu0 %v1261
  %1446 = vmatmul.f32.gmra.mxu0 %v1308
  %v1447 = vpop.f32.mrf.mxu0
  %v1448 = vadd.f32 %v1295, %v1447
  %1449 = vdwg.mxu0
  %1450 = vmatpush.msra.mxu0 0.0
  %1451 = vmatpush.msra.mxu0 0.0
  %1452 = vmatpush.msra.mxu0 0.0
  %1453 = vmatpush.msra.mxu0 0.0
  %1454 = vmatpush.msra.mxu0 0.0
  %1455 = vmatpush.msra.mxu0 0.0
  %1456 = vmatpush.msra.mxu0 0.0
  %1457 = vmatpush.msra.mxu0 0.0
  %1458 = vmatpush.msra.mxu0 0.0
  %1459 = vmatpush.msra.mxu0 0.0
  %1460 = vmatpush.msra.mxu0 0.0
  %1461 = vmatpush.msra.mxu0 0.0
  %1462 = vmatpush.msra.mxu0 %v1286
  %1463 = vmatpush.msra.mxu0 %v1278
  %1464 = vmatpush.msra.mxu0 %v1270
  %1465 = vmatpush.msra.mxu0 %v1262
  %1466 = vmatmul.f32.gmra.mxu0 %v1308
  %v1467 = vpop.f32.mrf.mxu0
  %v1468 = vadd.f32 %v1296, %v1467
  %1469 = vdwg.mxu0
  %vm1470 = vcmp.gt.f32.partialorder %v1328, 0.0
  %vm1471 = vcmp.gt.f32.partialorder %v1348, 0.0
  %vm1472 = vcmp.gt.f32.partialorder %v1368, 0.0
  %vm1473 = vcmp.gt.f32.partialorder %v1388, 0.0
  %vm1474 = vcmp.gt.f32.partialorder %v1408, 0.0
  %vm1475 = vcmp.gt.f32.partialorder %v1428, 0.0
  %vm1476 = vcmp.gt.f32.partialorder %v1448, 0.0
  %vm1477 = vcmp.gt.f32.partialorder %v1468, 0.0
  %v1478 = vstv %s42
  %v1479 = vmul.f32 %v1478, %v1328
  %v1480 = vmul.f32 %v1478, %v1348
  %v1481 = vmul.f32 %v1478, %v1368
  %v1482 = vmul.f32 %v1478, %v1388
  %v1483 = vmul.f32 %v1478, %v1408
  %v1484 = vmul.f32 %v1478, %v1428
  %v1485 = vmul.f32 %v1478, %v1448
  %v1486 = vmul.f32 %v1478, %v1468
  %v1487 = vsel %vm1470, %v1328, %v1479
  %v1488 = vsel %vm1471, %v1348, %v1480
  %v1489 = vsel %vm1472, %v1368, %v1481
  %v1490 = vsel %vm1473, %v1388, %v1482
  %v1491 = vsel %vm1474, %v1408, %v1483
  %v1492 = vsel %vm1475, %v1428, %v1484
  %v1493 = vsel %vm1476, %v1448, %v1485
  %v1494 = vsel %vm1477, %v1468, %v1486
  %v1495 = vld [vmem:[%s9] sm:$0xff]
  %v1496 = vld [vmem:[%s9 + $0x8] sm:$0xff]
  %v1497 = vld [vmem:[%s9 + $0x10] sm:$0xff]
  %v1498 = vld [vmem:[%s9 + $0x18] sm:$0xff]
  %v1499 = vld [vmem:[%s9 + $0x20] sm:$0xff]
  %v1500 = vld [vmem:[%s9 + $0x28] sm:$0xff]
  %v1501 = vld [vmem:[%s9 + $0x30] sm:$0xff]
  %v1502 = vld [vmem:[%s9 + $0x38] sm:$0xff]
  %v1503 = vld [vmem:[%s9 + $0x40] sm:$0xff]
  %v1504 = vld [vmem:[%s9 + $0x48] sm:$0xff]
  %v1505 = vld [vmem:[%s9 + $0x50] sm:$0xff]
  %v1506 = vld [vmem:[%s9 + $0x58] sm:$0xff]
  %v1507 = vld [vmem:[%s9 + $0x60] sm:$0xff]
  %v1508 = vld [vmem:[%s9 + $0x68] sm:$0xff]
  %v1509 = vld [vmem:[%s9 + $0x70] sm:$0xff]
  %v1510 = vld [vmem:[%s9 + $0x78] sm:$0xff]
  %v1511 = vld [vmem:[%s9 + $0x80] sm:$0xff]
  %v1512 = vld [vmem:[%s9 + $0x88] sm:$0xff]
  %v1513 = vld [vmem:[%s9 + $0x90] sm:$0xff]
  %v1514 = vld [vmem:[%s9 + $0x98] sm:$0xff]
  %v1515 = vld [vmem:[%s9 + $0xa0] sm:$0xff]
  %v1516 = vld [vmem:[%s9 + $0xa8] sm:$0xff]
  %v1517 = vld [vmem:[%s9 + $0xb0] sm:$0xff]
  %v1518 = vld [vmem:[%s9 + $0xb8] sm:$0xff]
  %v1519 = vld [vmem:[%s9 + $0xc0] sm:$0xff]
  %v1520 = vld [vmem:[%s9 + $0xc8] sm:$0xff]
  %v1521 = vld [vmem:[%s9 + $0xd0] sm:$0xff]
  %v1522 = vld [vmem:[%s9 + $0xd8] sm:$0xff]
  %v1523 = vld [vmem:[%s9 + $0xe0] sm:$0xff]
  %v1524 = vld [vmem:[%s9 + $0xe8] sm:$0xff]
  %v1525 = vld [vmem:[%s9 + $0xf0] sm:$0xff]
  %v1526 = vld [vmem:[%s9 + $0xf8] sm:$0xff]
  %v1527 = vld [vmem:[%s9 + $0x100] sm:$0xff]
  %v1528 = vld [vmem:[%s9 + $0x108] sm:$0xff]
  %v1529 = vld [vmem:[%s9 + $0x110] sm:$0xff]
  %v1530 = vld [vmem:[%s9 + $0x118] sm:$0xff]
  %v1531 = vld [vmem:[%s9 + $0x120] sm:$0xff]
  %v1532 = vld [vmem:[%s9 + $0x128] sm:$0xff]
  %v1533 = vld [vmem:[%s9 + $0x130] sm:$0xff]
  %v1534 = vld [vmem:[%s9 + $0x138] sm:$0xff]
  %v1535 = vld [vmem:[%s9 + $0x140] sm:$0xff]
  %v1536 = vld [vmem:[%s9 + $0x148] sm:$0xff]
  %v1537 = vld [vmem:[%s9 + $0x150] sm:$0xff]
  %v1538 = vld [vmem:[%s9 + $0x158] sm:$0xff]
  %v1539 = vld [vmem:[%s9 + $0x160] sm:$0xff]
  %v1540 = vld [vmem:[%s9 + $0x168] sm:$0xff]
  %v1541 = vld [vmem:[%s9 + $0x170] sm:$0xff]
  %v1542 = vld [vmem:[%s9 + $0x178] sm:$0xff]
  %v1543 = vld [vmem:[%s9 + $0x180] sm:$0xff]
  %v1544 = vld [vmem:[%s9 + $0x188] sm:$0xff]
  %v1545 = vld [vmem:[%s9 + $0x190] sm:$0xff]
  %v1546 = vld [vmem:[%s9 + $0x198] sm:$0xff]
  %v1547 = vld [vmem:[%s9 + $0x1a0] sm:$0xff]
  %v1548 = vld [vmem:[%s9 + $0x1a8] sm:$0xff]
  %v1549 = vld [vmem:[%s9 + $0x1b0] sm:$0xff]
  %v1550 = vld [vmem:[%s9 + $0x1b8] sm:$0xff]
  %v1551 = vld [vmem:[%s9 + $0x1c0] sm:$0xff]
  %v1552 = vld [vmem:[%s9 + $0x1c8] sm:$0xff]
  %v1553 = vld [vmem:[%s9 + $0x1d0] sm:$0xff]
  %v1554 = vld [vmem:[%s9 + $0x1d8] sm:$0xff]
  %v1555 = vld [vmem:[%s9 + $0x1e0] sm:$0xff]
  %v1556 = vld [vmem:[%s9 + $0x1e8] sm:$0xff]
  %v1557 = vld [vmem:[%s9 + $0x1f0] sm:$0xff]
  %v1558 = vld [vmem:[%s9 + $0x1f8] sm:$0xff]
  %v1559 = vld [vmem:[%s9 + $0x200] sm:$0xff]
  %v1560 = vld [vmem:[%s9 + $0x208] sm:$0xff]
  %v1561 = vld [vmem:[%s9 + $0x210] sm:$0xff]
  %v1562 = vld [vmem:[%s9 + $0x218] sm:$0xff]
  %v1563 = vld [vmem:[%s9 + $0x220] sm:$0xff]
  %v1564 = vld [vmem:[%s9 + $0x228] sm:$0xff]
  %v1565 = vld [vmem:[%s9 + $0x230] sm:$0xff]
  %v1566 = vld [vmem:[%s9 + $0x238] sm:$0xff]
  %v1567 = vld [vmem:[%s9 + $0x240] sm:$0xff]
  %v1568 = vld [vmem:[%s9 + $0x248] sm:$0xff]
  %v1569 = vld [vmem:[%s9 + $0x250] sm:$0xff]
  %v1570 = vld [vmem:[%s9 + $0x258] sm:$0xff]
  %v1571 = vld [vmem:[%s9 + $0x260] sm:$0xff]
  %v1572 = vld [vmem:[%s9 + $0x268] sm:$0xff]
  %v1573 = vld [vmem:[%s9 + $0x270] sm:$0xff]
  %v1574 = vld [vmem:[%s9 + $0x278] sm:$0xff]
  %v1575 = vld [vmem:[%s9 + $0x280] sm:$0xff]
  %v1576 = vld [vmem:[%s9 + $0x288] sm:$0xff]
  %v1577 = vld [vmem:[%s9 + $0x290] sm:$0xff]
  %v1578 = vld [vmem:[%s9 + $0x298] sm:$0xff]
  %v1579 = vld [vmem:[%s9 + $0x2a0] sm:$0xff]
  %v1580 = vld [vmem:[%s9 + $0x2a8] sm:$0xff]
  %v1581 = vld [vmem:[%s9 + $0x2b0] sm:$0xff]
  %v1582 = vld [vmem:[%s9 + $0x2b8] sm:$0xff]
  %v1583 = vld [vmem:[%s9 + $0x2c0] sm:$0xff]
  %v1584 = vld [vmem:[%s9 + $0x2c8] sm:$0xff]
  %v1585 = vld [vmem:[%s9 + $0x2d0] sm:$0xff]
  %v1586 = vld [vmem:[%s9 + $0x2d8] sm:$0xff]
  %v1587 = vld [vmem:[%s9 + $0x2e0] sm:$0xff]
  %v1588 = vld [vmem:[%s9 + $0x2e8] sm:$0xff]
  %v1589 = vld [vmem:[%s9 + $0x2f0] sm:$0xff]
  %v1590 = vld [vmem:[%s9 + $0x2f8] sm:$0xff]
  %v1591 = vld [vmem:[%s9 + $0x300] sm:$0xff]
  %v1592 = vld [vmem:[%s9 + $0x308] sm:$0xff]
  %v1593 = vld [vmem:[%s9 + $0x310] sm:$0xff]
  %v1594 = vld [vmem:[%s9 + $0x318] sm:$0xff]
  %v1595 = vld [vmem:[%s9 + $0x320] sm:$0xff]
  %v1596 = vld [vmem:[%s9 + $0x328] sm:$0xff]
  %v1597 = vld [vmem:[%s9 + $0x330] sm:$0xff]
  %v1598 = vld [vmem:[%s9 + $0x338] sm:$0xff]
  %v1599 = vld [vmem:[%s9 + $0x340] sm:$0xff]
  %v1600 = vld [vmem:[%s9 + $0x348] sm:$0xff]
  %v1601 = vld [vmem:[%s9 + $0x350] sm:$0xff]
  %v1602 = vld [vmem:[%s9 + $0x358] sm:$0xff]
  %v1603 = vld [vmem:[%s9 + $0x360] sm:$0xff]
  %v1604 = vld [vmem:[%s9 + $0x368] sm:$0xff]
  %v1605 = vld [vmem:[%s9 + $0x370] sm:$0xff]
  %v1606 = vld [vmem:[%s9 + $0x378] sm:$0xff]
  %v1607 = vld [vmem:[%s9 + $0x380] sm:$0xff]
  %v1608 = vld [vmem:[%s9 + $0x388] sm:$0xff]
  %v1609 = vld [vmem:[%s9 + $0x390] sm:$0xff]
  %v1610 = vld [vmem:[%s9 + $0x398] sm:$0xff]
  %v1611 = vld [vmem:[%s9 + $0x3a0] sm:$0xff]
  %v1612 = vld [vmem:[%s9 + $0x3a8] sm:$0xff]
  %v1613 = vld [vmem:[%s9 + $0x3b0] sm:$0xff]
  %v1614 = vld [vmem:[%s9 + $0x3b8] sm:$0xff]
  %v1615 = vld [vmem:[%s9 + $0x3c0] sm:$0xff]
  %v1616 = vld [vmem:[%s9 + $0x3c8] sm:$0xff]
  %v1617 = vld [vmem:[%s9 + $0x3d0] sm:$0xff]
  %v1618 = vld [vmem:[%s9 + $0x3d8] sm:$0xff]
  %v1619 = vld [vmem:[%s9 + $0x3e0] sm:$0xff]
  %v1620 = vld [vmem:[%s9 + $0x3e8] sm:$0xff]
  %v1621 = vld [vmem:[%s9 + $0x3f0] sm:$0xff]
  %v1622 = vld [vmem:[%s9 + $0x3f8] sm:$0xff]
  %v1623 = vld [vmem:[%s10] sm:$0x1]
  %v1625 = vperm.slane %v1623, 0
  %1627 = vmatpush.msra.mxu0 %v1510
  %1628 = vmatpush.msra.mxu0 %v1509
  %1629 = vmatpush.msra.mxu0 %v1508
  %1630 = vmatpush.msra.mxu0 %v1507
  %1631 = vmatpush.msra.mxu0 %v1506
  %1632 = vmatpush.msra.mxu0 %v1505
  %1633 = vmatpush.msra.mxu0 %v1504
  %1634 = vmatpush.msra.mxu0 %v1503
  %1635 = vmatpush.msra.mxu0 %v1502
  %1636 = vmatpush.msra.mxu0 %v1501
  %1637 = vmatpush.msra.mxu0 %v1500
  %1638 = vmatpush.msra.mxu0 %v1499
  %1639 = vmatpush.msra.mxu0 %v1498
  %1640 = vmatpush.msra.mxu0 %v1497
  %1641 = vmatpush.msra.mxu0 %v1496
  %1642 = vmatpush.msra.mxu0 %v1495
  %1643 = vmatmul.f32.gmra.mxu0 %v1487
  %v1644 = vpop.f32.mrf.mxu0
  %v1645 = vadd.f32 %v1625, %v1644
  %1646 = vdwg.mxu0
  %1647 = vmatpush.msra.mxu0 %v1526
  %1648 = vmatpush.msra.mxu0 %v1525
  %1649 = vmatpush.msra.mxu0 %v1524
  %1650 = vmatpush.msra.mxu0 %v1523
  %1651 = vmatpush.msra.mxu0 %v1522
  %1652 = vmatpush.msra.mxu0 %v1521
  %1653 = vmatpush.msra.mxu0 %v1520
  %1654 = vmatpush.msra.mxu0 %v1519
  %1655 = vmatpush.msra.mxu0 %v1518
  %1656 = vmatpush.msra.mxu0 %v1517
  %1657 = vmatpush.msra.mxu0 %v1516
  %1658 = vmatpush.msra.mxu0 %v1515
  %1659 = vmatpush.msra.mxu0 %v1514
  %1660 = vmatpush.msra.mxu0 %v1513
  %1661 = vmatpush.msra.mxu0 %v1512
  %1662 = vmatpush.msra.mxu0 %v1511
  %1663 = vmatmul.f32.gmra.mxu0 %v1488
  %v1664 = vpop.f32.mrf.mxu0
  %v1665 = vadd.f32 %v1645, %v1664
  %1666 = vdwg.mxu0
  %1667 = vmatpush.msra.mxu0 %v1542
  %1668 = vmatpush.msra.mxu0 %v1541
  %1669 = vmatpush.msra.mxu0 %v1540
  %1670 = vmatpush.msra.mxu0 %v1539
  %1671 = vmatpush.msra.mxu0 %v1538
  %1672 = vmatpush.msra.mxu0 %v1537
  %1673 = vmatpush.msra.mxu0 %v1536
  %1674 = vmatpush.msra.mxu0 %v1535
  %1675 = vmatpush.msra.mxu0 %v1534
  %1676 = vmatpush.msra.mxu0 %v1533
  %1677 = vmatpush.msra.mxu0 %v1532
  %1678 = vmatpush.msra.mxu0 %v1531
  %1679 = vmatpush.msra.mxu0 %v1530
  %1680 = vmatpush.msra.mxu0 %v1529
  %1681 = vmatpush.msra.mxu0 %v1528
  %1682 = vmatpush.msra.mxu0 %v1527
  %1683 = vmatmul.f32.gmra.mxu0 %v1489
  %v1684 = vpop.f32.mrf.mxu0
  %v1685 = vadd.f32 %v1665, %v1684
  %1686 = vdwg.mxu0
  %1687 = vmatpush.msra.mxu0 %v1558
  %1688 = vmatpush.msra.mxu0 %v1557
  %1689 = vmatpush.msra.mxu0 %v1556
  %1690 = vmatpush.msra.mxu0 %v1555
  %1691 = vmatpush.msra.mxu0 %v1554
  %1692 = vmatpush.msra.mxu0 %v1553
  %1693 = vmatpush.msra.mxu0 %v1552
  %1694 = vmatpush.msra.mxu0 %v1551
  %1695 = vmatpush.msra.mxu0 %v1550
  %1696 = vmatpush.msra.mxu0 %v1549
  %1697 = vmatpush.msra.mxu0 %v1548
  %1698 = vmatpush.msra.mxu0 %v1547
  %1699 = vmatpush.msra.mxu0 %v1546
  %1700 = vmatpush.msra.mxu0 %v1545
  %1701 = vmatpush.msra.mxu0 %v1544
  %1702 = vmatpush.msra.mxu0 %v1543
  %1703 = vmatmul.f32.gmra.mxu0 %v1490
  %v1704 = vpop.f32.mrf.mxu0
  %v1705 = vadd.f32 %v1685, %v1704
  %1706 = vdwg.mxu0
  %1707 = vmatpush.msra.mxu0 %v1574
  %1708 = vmatpush.msra.mxu0 %v1573
  %1709 = vmatpush.msra.mxu0 %v1572
  %1710 = vmatpush.msra.mxu0 %v1571
  %1711 = vmatpush.msra.mxu0 %v1570
  %1712 = vmatpush.msra.mxu0 %v1569
  %1713 = vmatpush.msra.mxu0 %v1568
  %1714 = vmatpush.msra.mxu0 %v1567
  %1715 = vmatpush.msra.mxu0 %v1566
  %1716 = vmatpush.msra.mxu0 %v1565
  %1717 = vmatpush.msra.mxu0 %v1564
  %1718 = vmatpush.msra.mxu0 %v1563
  %1719 = vmatpush.msra.mxu0 %v1562
  %1720 = vmatpush.msra.mxu0 %v1561
  %1721 = vmatpush.msra.mxu0 %v1560
  %1722 = vmatpush.msra.mxu0 %v1559
  %1723 = vmatmul.f32.gmra.mxu0 %v1491
  %v1724 = vpop.f32.mrf.mxu0
  %v1725 = vadd.f32 %v1705, %v1724
  %1726 = vdwg.mxu0
  %1727 = vmatpush.msra.mxu0 %v1590
  %1728 = vmatpush.msra.mxu0 %v1589
  %1729 = vmatpush.msra.mxu0 %v1588
  %1730 = vmatpush.msra.mxu0 %v1587
  %1731 = vmatpush.msra.mxu0 %v1586
  %1732 = vmatpush.msra.mxu0 %v1585
  %1733 = vmatpush.msra.mxu0 %v1584
  %1734 = vmatpush.msra.mxu0 %v1583
  %1735 = vmatpush.msra.mxu0 %v1582
  %1736 = vmatpush.msra.mxu0 %v1581
  %1737 = vmatpush.msra.mxu0 %v1580
  %1738 = vmatpush.msra.mxu0 %v1579
  %1739 = vmatpush.msra.mxu0 %v1578
  %1740 = vmatpush.msra.mxu0 %v1577
  %1741 = vmatpush.msra.mxu0 %v1576
  %1742 = vmatpush.msra.mxu0 %v1575
  %1743 = vmatmul.f32.gmra.mxu0 %v1492
  %v1744 = vpop.f32.mrf.mxu0
  %v1745 = vadd.f32 %v1725, %v1744
  %1746 = vdwg.mxu0
  %1747 = vmatpush.msra.mxu0 %v1606
  %1748 = vmatpush.msra.mxu0 %v1605
  %1749 = vmatpush.msra.mxu0 %v1604
  %1750 = vmatpush.msra.mxu0 %v1603
  %1751 = vmatpush.msra.mxu0 %v1602
  %1752 = vmatpush.msra.mxu0 %v1601
  %1753 = vmatpush.msra.mxu0 %v1600
  %1754 = vmatpush.msra.mxu0 %v1599
  %1755 = vmatpush.msra.mxu0 %v1598
  %1756 = vmatpush.msra.mxu0 %v1597
  %1757 = vmatpush.msra.mxu0 %v1596
  %1758 = vmatpush.msra.mxu0 %v1595
  %1759 = vmatpush.msra.mxu0 %v1594
  %1760 = vmatpush.msra.mxu0 %v1593
  %1761 = vmatpush.msra.mxu0 %v1592
  %1762 = vmatpush.msra.mxu0 %v1591
  %1763 = vmatmul.f32.gmra.mxu0 %v1493
  %v1764 = vpop.f32.mrf.mxu0
  %v1765 = vadd.f32 %v1745, %v1764
  %1766 = vdwg.mxu0
  %1767 = vmatpush.msra.mxu0 %v1622
  %1768 = vmatpush.msra.mxu0 %v1621
  %1769 = vmatpush.msra.mxu0 %v1620
  %1770 = vmatpush.msra.mxu0 %v1619
  %1771 = vmatpush.msra.mxu0 %v1618
  %1772 = vmatpush.msra.mxu0 %v1617
  %1773 = vmatpush.msra.mxu0 %v1616
  %1774 = vmatpush.msra.mxu0 %v1615
  %1775 = vmatpush.msra.mxu0 %v1614
  %1776 = vmatpush.msra.mxu0 %v1613
  %1777 = vmatpush.msra.mxu0 %v1612
  %1778 = vmatpush.msra.mxu0 %v1611
  %1779 = vmatpush.msra.mxu0 %v1610
  %1780 = vmatpush.msra.mxu0 %v1609
  %1781 = vmatpush.msra.mxu0 %v1608
  %1782 = vmatpush.msra.mxu0 %v1607
  %1783 = vmatmul.f32.gmra.mxu0 %v1494
  %v1784 = vpop.f32.mrf.mxu0
  %v1785 = vadd.f32 %v1765, %v1784
  %1786 = vdwg.mxu0
  %vm1787 = vcmp.gt.f32.partialorder %v1785, 0.0
  %v1788 = vmul.f32 %v1478, %v1785
  %v1789 = vsel %vm1787, %v1785, %v1788
  %1790 = vst [vmem:[%s12] sm:$0xff] %v1789
  // Predicated region
  $region50: #{lstm_model_forward.1} parent=0 // pred_check
    _
  $region51: #{lstm_model_forward.1} parent=0 // pred_check_branch
    %1792 = sbr.rel (0) target = $region53
  $region52: #{lstm_model_forward.1} parent=0 // pred_region
    _
  $region53: #{lstm_model_forward.1} parent=0 // pred_fallthru
    _
  // Predicated region
  $region54: #{lstm_model_forward.1} parent=0 // pred_check
    _
  $region55: #{lstm_model_forward.1} parent=0 // pred_check_branch
    %1794 = sbr.rel (0) target = $region57
  $region56: #{lstm_model_forward.1} parent=0 // pred_region
    _
  $region57: #{lstm_model_forward.1} parent=0 // pred_fallthru
    _

</llo_original>
